<compile_context>
chip_gen: v7x
topology: tpu7x:2x2x1
jax: 0.10.0
libtpu: 0.0.40
codegen_flags: <defaults>
</compile_context>

<pallas_src>
import functools

import jax
import jax.numpy as jnp
from jax.experimental import pallas as pl
from jax.experimental.pallas import tpu as pltpu


# ----------------------------------------------------------------------------
# Fused per-level kernel: warp -> concat -> conv3x3 + LReLU -> conv3x3
# ----------------------------------------------------------------------------
def _level_kernel(x_ref, f_ref, coord_ref, bsum_ref, w1_ref, b1_ref, w2_ref,
                  b2_ref, o_ref, *, T, C, H, W, compute_dtype):
    # x_ref    : (1, T, C*W, H)   x_ref[0,t,c*W+w,h] == x[b,t,c,h,w]
    # f_ref    : (1, T, 2, 1, HW) optical flow, ch0 = dx (horiz), ch1 = dy (f32)
    # coord_ref: (2, 1, HW)       row / col index of every output pixel (f32)
    # bsum_ref : (C, C*W)         block-sum selector, bsum[c, c*W+w] = 1
    # w1_ref   : (9, MID, T*C)    conv1 tap weights (tap k = 3*kh + kw)
    # b1_ref   : (MID, 1)         f32
    # w2_ref   : (9, OC, MID)     conv2 tap weights
    # b2_ref   : (OC, 1)          f32
    # o_ref    : (1, OC, HW)      NCHW output, H*W flattened on lanes
    HW = H * W
    MID = w1_ref.shape[1]
    OC = w2_ref.shape[1]

    row_map = coord_ref[0]                                    # (1, HW) f32
    col_map = coord_ref[1]                                    # (1, HW) f32
    h_iota = jax.lax.broadcasted_iota(jnp.int32, (H, HW), 0)
    w_iota = jax.lax.broadcasted_iota(jnp.int32, (W, HW), 0)

    # ---- 1. bilinear backward warp (channel-batched, zeros padding) --------
    # warped[c, p] = sum_h sum_w Ky[h, p] * Kx[w, p] * x[c, h, w]
    # Out-of-range corners match no iota row -> contribute zero
    # (grid_sample padding_mode='zeros').
    warped_frames = []
    for t in range(T):                                        # static unroll
        dx = f_ref[0, t, 0]                                   # (1, HW) f32
        dy = f_ref[0, t, 1]
        sx = col_map + dx
        sy = row_map + dy
        x0f = jnp.floor(sx)
        y0f = jnp.floor(sy)
        wx = sx - x0f
        wy = sy - y0f
        x0 = x0f.astype(jnp.int32)
        y0 = y0f.astype(jnp.int32)
        # One-hot bilinear kernels with the (1-w)/w scaling fused in the select.
        ky = (jnp.where(h_iota == y0, 1.0 - wy, 0.0)
              + jnp.where(h_iota == y0 + 1, wy, 0.0))         # (H, HW) f32
        kx = (jnp.where(w_iota == x0, 1.0 - wx, 0.0)
              + jnp.where(w_iota == x0 + 1, wx, 0.0))         # (W, HW) f32

        xt = x_ref[0, t]                                      # (C*W, H)
        tmp = jnp.dot(xt, ky.astype(compute_dtype),
                      preferred_element_type=jnp.float32)     # (C*W, HW) f32
        kxt = jnp.concatenate([kx] * C, axis=0)               # (C*W, HW) f32
        prod = (tmp * kxt).astype(compute_dtype)
        wt = jnp.dot(bsum_ref[...], prod,
                     preferred_element_type=jnp.float32)      # (C, HW) f32
        warped_frames.append(wt.astype(compute_dtype))

    cat = jnp.concatenate(warped_frames, axis=0)              # (T*C, HW)

    # ---- 2./3. 3x3 convs: 9 accumulated tap matmuls, no im2col -------------
    mask_l = (col_map > 0.5).astype(jnp.float32)              # x-1 >= 0
    mask_r = (col_map < W - 1.5).astype(jnp.float32)          # x+1 <= W-1

    def shift_cols(a, s):
        # result[:, p] = a[:, p + s] if 0 <= p + s < HW else 0   (s static)
        if s == 0:
            return a
        pad = jnp.zeros((a.shape[0], abs(s)), a.dtype)
        if s > 0:
            return jnp.concatenate([a[:, s:], pad], axis=1)
        return jnp.concatenate([pad, a[:, :s]], axis=1)

    def conv3x3(act, w_ref, b_ref, cout):
        acc = jnp.zeros((cout, HW), jnp.float32)
        for kh in range(3):
            for kw in range(3):
                oy, ox = kh - 1, kw - 1
                shifted = shift_cols(act, oy * W + ox)        # (cin, HW)
                part = jnp.dot(w_ref[3 * kh + kw], shifted,
                               preferred_element_type=jnp.float32)
                if ox == -1:                                  # horizontal zero pad
                    part = part * mask_l
                elif ox == 1:
                    part = part * mask_r
                acc = acc + part
        return acc + b_ref[...]                               # (cout, HW) f32

    h1 = conv3x3(cat, w1_ref, b1_ref, MID)
    h1 = jnp.where(h1 > 0, h1, 0.1 * h1).astype(compute_dtype)   # LeakyReLU(0.1)
    out = conv3x3(h1, w2_ref, b2_ref, OC)
    o_ref[0] = out.astype(o_ref.dtype)                        # lane-dense store


# ----------------------------------------------------------------------------
# Per-level MotionCompensatedFeatureFusion wrapper (single fused pallas_call)
# ----------------------------------------------------------------------------
def mcff_forward(x, of, params, *, compute_dtype=jnp.bfloat16):
    """One pyramid level.  params use the PyTorch Conv2d layout:
         w1: (MID, T*C, 3, 3)  b1: (MID,)   (conv on the T warped frames, concat)
         w2: (OC,  MID, 3, 3)  b2: (OC,)
       compute_dtype: MXU-operand dtype (bf16 recommended on v6e/v7x; use
       jnp.float32 on v5e / for bit-closer numerics).  All elementwise warp
       math and all accumulations stay in f32 regardless."""
    B, T, C, H, W = x.shape
    HW = H * W
    MID, cin1 = params["w1"].shape[:2]
    OC = params["w2"].shape[0]
    assert cin1 == T * C and params["w2"].shape[1] == MID

    # PyTorch (Cout, Cin, kh, kw) -> per-tap (9, Cout, Cin); pre-cast once.
    w1 = jnp.transpose(params["w1"], (2, 3, 0, 1)).reshape(9, MID, T * C)
    w2 = jnp.transpose(params["w2"], (2, 3, 0, 1)).reshape(9, OC, MID)
    w1 = w1.astype(compute_dtype)
    w2 = w2.astype(compute_dtype)
    b1 = params["b1"].reshape(MID, 1).astype(jnp.float32)
    b2 = params["b2"].reshape(OC, 1).astype(jnp.float32)

    # (B,T,C,H,W) -> (B,T,C*W,H): one channel-batched (C*W,H)@(H,HW) warp
    # matmul per frame instead of C tiny per-channel ones.
    x_r = jnp.transpose(x, (0, 1, 2, 4, 3)).reshape(B, T, C * W, H)
    x_r = x_r.astype(compute_dtype)
    of_r = of.astype(jnp.float32).reshape(B, T, 2, 1, HW)

    # Per-pixel coordinates and the channel block-sum selector are built on the
    # host side (avoids in-kernel integer div/mod and lane-splitting reshapes).
    rows = jnp.repeat(jnp.arange(H, dtype=jnp.float32), W)
    cols = jnp.tile(jnp.arange(W, dtype=jnp.float32), H)
    coords = jnp.stack([rows, cols]).reshape(2, 1, HW)
    bsum = jnp.repeat(jnp.eye(C, dtype=compute_dtype), W, axis=1)   # (C, C*W)

    # Explicit VMEM budget: double-buffered blocks + constants + live values.
    cd = jnp.dtype(compute_dtype).itemsize
    blocks = 2 * (T * C * W * H * cd + T * 2 * HW * 4 + OC * HW * 4)
    consts = (w1.size + w2.size + bsum.size) * cd + (MID + OC + 2 * HW) * 4
    live = (2 * C * W * HW + (H + W) * HW) * 4 + (T * C + MID + OC) * HW * (4 + cd)
    vmem_limit = int(min(max(blocks + consts + live + (4 << 20), 32 << 20),
                         64 << 20))

    kern = functools.partial(_level_kernel, T=T, C=C, H=H, W=W,
                             compute_dtype=compute_dtype)
    out = pl.pallas_call(
        kern,
        out_shape=jax.ShapeDtypeStruct((B, OC, HW), jnp.float32),
        grid=(B,),
        in_specs=[
            pl.BlockSpec((1, T, C * W, H), lambda b: (b, 0, 0, 0)),
            pl.BlockSpec((1, T, 2, 1, HW), lambda b: (b, 0, 0, 0, 0)),
            pl.BlockSpec((2, 1, HW), lambda b: (0, 0, 0)),
            pl.BlockSpec((C, C * W), lambda b: (0, 0)),
            pl.BlockSpec((9, MID, T * C), lambda b: (0, 0, 0)),
            pl.BlockSpec((MID, 1), lambda b: (0, 0)),
            pl.BlockSpec((9, OC, MID), lambda b: (0, 0, 0)),
            pl.BlockSpec((OC, 1), lambda b: (0, 0)),
        ],
        out_specs=pl.BlockSpec((1, OC, HW), lambda b: (b, 0, 0)),
        compiler_params=pltpu.CompilerParams(
            dimension_semantics=("parallel",),
            vmem_limit_bytes=vmem_limit),
    )(x_r, of_r, coords, bsum, w1, b1, w2, b2)
    # Free metadata reshape to the PyTorch NCHW output layout.
    return out.reshape(B, OC, H, W)


# ----------------------------------------------------------------------------
# Pyramid wrapper (PyramidMotionCompensatedFeatureFusion.forward,
# use_previous=False default path)
# ----------------------------------------------------------------------------
def pyramid_forward(xs, of, level_params, *, compute_dtype=jnp.bfloat16):
    b, t, c2, _, _ = of.shape
    ofs = []
    for i, xlvl in enumerate(xs):
        h_, w_ = xlvl.shape[-2], xlvl.shape[-1]
        of_l = jax.image.resize(of, (b, t, c2, h_, w_), method="bilinear",
                                antialias=False)   # ~F.interpolate(align_corners=False)
        ofs.append(of_l / (2.0 ** i))

    out = []
    for i in range(len(xs) - 1, -1, -1):           # coarse -> fine, as reference
        out.append(mcff_forward(xs[i], ofs[i], level_params[i],
                                compute_dtype=compute_dtype))
    return out[::-1]


# ----------------------------------------------------------------------------
if __name__ == "__main__":
    key = jax.random.PRNGKey(0)
    B, T = 2, 3
    in_channels = [4, 8]
    out_channels = [4, 8]
    mid_channels_scale = 2
    spatial = [(16, 16), (8, 8)]
    H0, W0 = spatial[0]

    keys = jax.random.split(key, 8)
    xs = [jax.random.normal(keys[i], (B, T, in_channels[i], h, w), jnp.float32)
          for i, (h, w) in enumerate(spatial)]
    of = 2.0 * jax.random.normal(keys[2], (B, T, 2, H0, W0), jnp.float32)

    level_params = []
    for lvl, (ic, oc) in enumerate(zip(in_channels, out_channels)):
        mid = ic * mid_channels_scale
        k1, k2 = jax.random.split(keys[4 + lvl], 2)
        level_params.append(dict(
            # PyTorch Conv2d layout: (Cout, Cin, kh, kw)
            w1=0.05 * jax.random.normal(k1, (mid, T * ic, 3, 3), jnp.float32),
            b1=jnp.zeros((mid,), jnp.float32),
            w2=0.05 * jax.random.normal(k2, (oc, mid, 3, 3), jnp.float32),
            b2=jnp.zeros((oc,), jnp.float32),
        ))

    outs = pyramid_forward(xs, of, level_params)
    for lvl, o in enumerate(outs):
        jax.block_until_ready(o)
        expected = (B, out_channels[lvl], *spatial[lvl])
        assert o.shape == expected, (o.shape, expected)
        assert bool(jnp.all(jnp.isfinite(o))), f"non-finite output, level {lvl}"
    print("KERNEL_OK")
</pallas_src>

<mosaic_0001>
module attributes {stable_mosaic.version = 11 : i64} {
  func.func @_level_kernel(%arg0: i32, %arg1: memref<1x3x64x8xbf16, #tpu.memory_space<vmem>>, %arg2: memref<1x3x2x1x64xf32, #tpu.memory_space<vmem>>, %arg3: memref<2x1x64xf32, #tpu.memory_space<vmem>>, %arg4: memref<8x64xbf16, #tpu.memory_space<vmem>>, %arg5: memref<9x16x24xbf16, #tpu.memory_space<vmem>>, %arg6: memref<16x1xf32, #tpu.memory_space<vmem>>, %arg7: memref<9x8x16xbf16, #tpu.memory_space<vmem>>, %arg8: memref<8x1xf32, #tpu.memory_space<vmem>>, %arg9: memref<1x8x64xf32, #tpu.memory_space<vmem>>) attributes {dimension_semantics = [#tpu.dimension_semantics<parallel>], iteration_bounds = array<i64: 2>, scalar_prefetch = 0 : i64, scratch_operands = 0 : i64, tpu.core_type = #tpu.core_type<tc>, window_params = [{transform_indices = @transform_0, window_bounds = array<i64: 1, 3, 64, 8>}, {transform_indices = @transform_1, window_bounds = array<i64: 1, 3, 2, 1, 64>}, {pipeline_mode = #tpu.pipeline_mode<synchronous>, transform_indices = @transform_2, window_bounds = array<i64: 2, 1, 64>}, {pipeline_mode = #tpu.pipeline_mode<synchronous>, transform_indices = @transform_3, window_bounds = array<i64: 8, 64>}, {pipeline_mode = #tpu.pipeline_mode<synchronous>, transform_indices = @transform_4, window_bounds = array<i64: 9, 16, 24>}, {pipeline_mode = #tpu.pipeline_mode<synchronous>, transform_indices = @transform_5, window_bounds = array<i64: 16, 1>}, {pipeline_mode = #tpu.pipeline_mode<synchronous>, transform_indices = @transform_6, window_bounds = array<i64: 9, 8, 16>}, {pipeline_mode = #tpu.pipeline_mode<synchronous>, transform_indices = @transform_7, window_bounds = array<i64: 8, 1>}, {transform_indices = @transform_8, window_bounds = array<i64: 1, 8, 64>}]} {
    %c0 = arith.constant 0 : index
    %c0_0 = arith.constant 0 : index
    %c0_1 = arith.constant 0 : index
    %0 = vector.load %arg3[%c0, %c0_0, %c0_1] : memref<2x1x64xf32, #tpu.memory_space<vmem>>, vector<1x1x64xf32>
    %1 = vector.shape_cast %0 : vector<1x1x64xf32> to vector<1x64xf32>
    %c1 = arith.constant 1 : index
    %c0_2 = arith.constant 0 : index
    %c0_3 = arith.constant 0 : index
    %2 = vector.load %arg3[%c1, %c0_2, %c0_3] : memref<2x1x64xf32, #tpu.memory_space<vmem>>, vector<1x1x64xf32>
    %3 = vector.shape_cast %2 : vector<1x1x64xf32> to vector<1x64xf32>
    %4 = tpu.iota {dimensions = array<i32: 0>} : vector<8x64xi32>
    %5 = tpu.iota {dimensions = array<i32: 0>} : vector<8x64xi32>
    %c0_4 = arith.constant 0 : index
    %c0_5 = arith.constant 0 : index
    %c0_6 = arith.constant 0 : index
    %c0_7 = arith.constant 0 : index
    %c0_8 = arith.constant 0 : index
    %6 = vector.load %arg2[%c0_4, %c0_5, %c0_6, %c0_7, %c0_8] : memref<1x3x2x1x64xf32, #tpu.memory_space<vmem>>, vector<1x1x1x1x64xf32>
    %7 = vector.shape_cast %6 : vector<1x1x1x1x64xf32> to vector<1x64xf32>
    %c0_9 = arith.constant 0 : index
    %c0_10 = arith.constant 0 : index
    %c1_11 = arith.constant 1 : index
    %c0_12 = arith.constant 0 : index
    %c0_13 = arith.constant 0 : index
    %8 = vector.load %arg2[%c0_9, %c0_10, %c1_11, %c0_12, %c0_13] : memref<1x3x2x1x64xf32, #tpu.memory_space<vmem>>, vector<1x1x1x1x64xf32>
    %9 = vector.shape_cast %8 : vector<1x1x1x1x64xf32> to vector<1x64xf32>
    %10 = arith.addf %3, %7 : vector<1x64xf32>
    %11 = arith.addf %1, %9 : vector<1x64xf32>
    %12 = math.floor %10 : vector<1x64xf32>
    %13 = math.floor %11 : vector<1x64xf32>
    %14 = arith.subf %10, %12 : vector<1x64xf32>
    %15 = arith.subf %11, %13 : vector<1x64xf32>
    %16 = arith.fptosi %12 : vector<1x64xf32> to vector<1x64xi32>
    %17 = arith.fptosi %13 : vector<1x64xf32> to vector<1x64xi32>
    %18 = vector.broadcast %17 : vector<1x64xi32> to vector<8x64xi32>
    %19 = arith.cmpi eq, %4, %18 : vector<8x64xi32>
    %cst = arith.constant 1.000000e+00 : f32
    %20 = vector.broadcast %cst : f32 to vector<1x64xf32>
    %21 = arith.subf %20, %15 : vector<1x64xf32>
    %cst_14 = arith.constant 0.000000e+00 : f32
    %22 = vector.shape_cast %21 : vector<1x64xf32> to vector<1x64xf32>
    %23 = vector.broadcast %22 : vector<1x64xf32> to vector<8x64xf32>
    %24 = vector.broadcast %cst_14 : f32 to vector<8x64xf32>
    %25 = arith.select %19, %23, %24 : vector<8x64xi1>, vector<8x64xf32>
    %c1_i32 = arith.constant 1 : i32
    %26 = vector.broadcast %c1_i32 : i32 to vector<1x64xi32>
    %27 = arith.addi %17, %26 : vector<1x64xi32>
    %28 = vector.broadcast %27 : vector<1x64xi32> to vector<8x64xi32>
    %29 = arith.cmpi eq, %4, %28 : vector<8x64xi32>
    %cst_15 = arith.constant 0.000000e+00 : f32
    %30 = vector.shape_cast %15 : vector<1x64xf32> to vector<1x64xf32>
    %31 = vector.broadcast %30 : vector<1x64xf32> to vector<8x64xf32>
    %32 = vector.broadcast %cst_15 : f32 to vector<8x64xf32>
    %33 = arith.select %29, %31, %32 : vector<8x64xi1>, vector<8x64xf32>
    %34 = arith.addf %25, %33 : vector<8x64xf32>
    %35 = vector.broadcast %16 : vector<1x64xi32> to vector<8x64xi32>
    %36 = arith.cmpi eq, %5, %35 : vector<8x64xi32>
    %cst_16 = arith.constant 1.000000e+00 : f32
    %37 = vector.broadcast %cst_16 : f32 to vector<1x64xf32>
    %38 = arith.subf %37, %14 : vector<1x64xf32>
    %cst_17 = arith.constant 0.000000e+00 : f32
    %39 = vector.shape_cast %38 : vector<1x64xf32> to vector<1x64xf32>
    %40 = vector.broadcast %39 : vector<1x64xf32> to vector<8x64xf32>
    %41 = vector.broadcast %cst_17 : f32 to vector<8x64xf32>
    %42 = arith.select %36, %40, %41 : vector<8x64xi1>, vector<8x64xf32>
    %c1_i32_18 = arith.constant 1 : i32
    %43 = vector.broadcast %c1_i32_18 : i32 to vector<1x64xi32>
    %44 = arith.addi %16, %43 : vector<1x64xi32>
    %45 = vector.broadcast %44 : vector<1x64xi32> to vector<8x64xi32>
    %46 = arith.cmpi eq, %5, %45 : vector<8x64xi32>
    %cst_19 = arith.constant 0.000000e+00 : f32
    %47 = vector.shape_cast %14 : vector<1x64xf32> to vector<1x64xf32>
    %48 = vector.broadcast %47 : vector<1x64xf32> to vector<8x64xf32>
    %49 = vector.broadcast %cst_19 : f32 to vector<8x64xf32>
    %50 = arith.select %46, %48, %49 : vector<8x64xi1>, vector<8x64xf32>
    %51 = arith.addf %42, %50 : vector<8x64xf32>
    %c0_20 = arith.constant 0 : index
    %c0_21 = arith.constant 0 : index
    %c0_22 = arith.constant 0 : index
    %c0_23 = arith.constant 0 : index
    %52 = vector.load %arg1[%c0_20, %c0_21, %c0_22, %c0_23] : memref<1x3x64x8xbf16, #tpu.memory_space<vmem>>, vector<1x1x64x8xbf16>
    %53 = vector.shape_cast %52 : vector<1x1x64x8xbf16> to vector<64x8xbf16>
    %54 = arith.truncf %34 : vector<8x64xf32> to vector<8x64xbf16>
    %cst_24 = arith.constant dense<0.000000e+00> : vector<64x64xf32>
    %55 = tpu.matmul %53, %54, %cst_24 {dimension_numbers = #tpu.dot_dimension_numbers<[1], [0], [0], [1], [0, 0, 1, 1], [], []>} : vector<64x8xbf16>, vector<8x64xbf16>, vector<64x64xf32> -> vector<64x64xf32>
    %56 = tpu.concatenate %51, %51, %51, %51, %51, %51, %51, %51 in 0 : vector<8x64xf32>, vector<8x64xf32>, vector<8x64xf32>, vector<8x64xf32>, vector<8x64xf32>, vector<8x64xf32>, vector<8x64xf32>, vector<8x64xf32> -> vector<64x64xf32>
    %57 = arith.mulf %55, %56 : vector<64x64xf32>
    %58 = arith.truncf %57 : vector<64x64xf32> to vector<64x64xbf16>
    %c0_25 = arith.constant 0 : index
    %c0_26 = arith.constant 0 : index
    %59 = vector.load %arg4[%c0_25, %c0_26] : memref<8x64xbf16, #tpu.memory_space<vmem>>, vector<8x64xbf16>
    %cst_27 = arith.constant dense<0.000000e+00> : vector<8x64xf32>
    %60 = tpu.matmul %59, %58, %cst_27 {dimension_numbers = #tpu.dot_dimension_numbers<[1], [0], [0], [1], [0, 0, 1, 1], [], []>} : vector<8x64xbf16>, vector<64x64xbf16>, vector<8x64xf32> -> vector<8x64xf32>
    %61 = arith.truncf %60 : vector<8x64xf32> to vector<8x64xbf16>
    %c0_28 = arith.constant 0 : index
    %c1_29 = arith.constant 1 : index
    %c0_30 = arith.constant 0 : index
    %c0_31 = arith.constant 0 : index
    %c0_32 = arith.constant 0 : index
    %62 = vector.load %arg2[%c0_28, %c1_29, %c0_30, %c0_31, %c0_32] : memref<1x3x2x1x64xf32, #tpu.memory_space<vmem>>, vector<1x1x1x1x64xf32>
    %63 = vector.shape_cast %62 : vector<1x1x1x1x64xf32> to vector<1x64xf32>
    %c0_33 = arith.constant 0 : index
    %c1_34 = arith.constant 1 : index
    %c1_35 = arith.constant 1 : index
    %c0_36 = arith.constant 0 : index
    %c0_37 = arith.constant 0 : index
    %64 = vector.load %arg2[%c0_33, %c1_34, %c1_35, %c0_36, %c0_37] : memref<1x3x2x1x64xf32, #tpu.memory_space<vmem>>, vector<1x1x1x1x64xf32>
    %65 = vector.shape_cast %64 : vector<1x1x1x1x64xf32> to vector<1x64xf32>
    %66 = arith.addf %3, %63 : vector<1x64xf32>
    %67 = arith.addf %1, %65 : vector<1x64xf32>
    %68 = math.floor %66 : vector<1x64xf32>
    %69 = math.floor %67 : vector<1x64xf32>
    %70 = arith.subf %66, %68 : vector<1x64xf32>
    %71 = arith.subf %67, %69 : vector<1x64xf32>
    %72 = arith.fptosi %68 : vector<1x64xf32> to vector<1x64xi32>
    %73 = arith.fptosi %69 : vector<1x64xf32> to vector<1x64xi32>
    %74 = vector.broadcast %73 : vector<1x64xi32> to vector<8x64xi32>
    %75 = arith.cmpi eq, %4, %74 : vector<8x64xi32>
    %cst_38 = arith.constant 1.000000e+00 : f32
    %76 = vector.broadcast %cst_38 : f32 to vector<1x64xf32>
    %77 = arith.subf %76, %71 : vector<1x64xf32>
    %cst_39 = arith.constant 0.000000e+00 : f32
    %78 = vector.shape_cast %77 : vector<1x64xf32> to vector<1x64xf32>
    %79 = vector.broadcast %78 : vector<1x64xf32> to vector<8x64xf32>
    %80 = vector.broadcast %cst_39 : f32 to vector<8x64xf32>
    %81 = arith.select %75, %79, %80 : vector<8x64xi1>, vector<8x64xf32>
    %c1_i32_40 = arith.constant 1 : i32
    %82 = vector.broadcast %c1_i32_40 : i32 to vector<1x64xi32>
    %83 = arith.addi %73, %82 : vector<1x64xi32>
    %84 = vector.broadcast %83 : vector<1x64xi32> to vector<8x64xi32>
    %85 = arith.cmpi eq, %4, %84 : vector<8x64xi32>
    %cst_41 = arith.constant 0.000000e+00 : f32
    %86 = vector.shape_cast %71 : vector<1x64xf32> to vector<1x64xf32>
    %87 = vector.broadcast %86 : vector<1x64xf32> to vector<8x64xf32>
    %88 = vector.broadcast %cst_41 : f32 to vector<8x64xf32>
    %89 = arith.select %85, %87, %88 : vector<8x64xi1>, vector<8x64xf32>
    %90 = arith.addf %81, %89 : vector<8x64xf32>
    %91 = vector.broadcast %72 : vector<1x64xi32> to vector<8x64xi32>
    %92 = arith.cmpi eq, %5, %91 : vector<8x64xi32>
    %cst_42 = arith.constant 1.000000e+00 : f32
    %93 = vector.broadcast %cst_42 : f32 to vector<1x64xf32>
    %94 = arith.subf %93, %70 : vector<1x64xf32>
    %cst_43 = arith.constant 0.000000e+00 : f32
    %95 = vector.shape_cast %94 : vector<1x64xf32> to vector<1x64xf32>
    %96 = vector.broadcast %95 : vector<1x64xf32> to vector<8x64xf32>
    %97 = vector.broadcast %cst_43 : f32 to vector<8x64xf32>
    %98 = arith.select %92, %96, %97 : vector<8x64xi1>, vector<8x64xf32>
    %c1_i32_44 = arith.constant 1 : i32
    %99 = vector.broadcast %c1_i32_44 : i32 to vector<1x64xi32>
    %100 = arith.addi %72, %99 : vector<1x64xi32>
    %101 = vector.broadcast %100 : vector<1x64xi32> to vector<8x64xi32>
    %102 = arith.cmpi eq, %5, %101 : vector<8x64xi32>
    %cst_45 = arith.constant 0.000000e+00 : f32
    %103 = vector.shape_cast %70 : vector<1x64xf32> to vector<1x64xf32>
    %104 = vector.broadcast %103 : vector<1x64xf32> to vector<8x64xf32>
    %105 = vector.broadcast %cst_45 : f32 to vector<8x64xf32>
    %106 = arith.select %102, %104, %105 : vector<8x64xi1>, vector<8x64xf32>
    %107 = arith.addf %98, %106 : vector<8x64xf32>
    %c0_46 = arith.constant 0 : index
    %c1_47 = arith.constant 1 : index
    %c0_48 = arith.constant 0 : index
    %c0_49 = arith.constant 0 : index
    %108 = vector.load %arg1[%c0_46, %c1_47, %c0_48, %c0_49] : memref<1x3x64x8xbf16, #tpu.memory_space<vmem>>, vector<1x1x64x8xbf16>
    %109 = vector.shape_cast %108 : vector<1x1x64x8xbf16> to vector<64x8xbf16>
    %110 = arith.truncf %90 : vector<8x64xf32> to vector<8x64xbf16>
    %cst_50 = arith.constant dense<0.000000e+00> : vector<64x64xf32>
    %111 = tpu.matmul %109, %110, %cst_50 {dimension_numbers = #tpu.dot_dimension_numbers<[1], [0], [0], [1], [0, 0, 1, 1], [], []>} : vector<64x8xbf16>, vector<8x64xbf16>, vector<64x64xf32> -> vector<64x64xf32>
    %112 = tpu.concatenate %107, %107, %107, %107, %107, %107, %107, %107 in 0 : vector<8x64xf32>, vector<8x64xf32>, vector<8x64xf32>, vector<8x64xf32>, vector<8x64xf32>, vector<8x64xf32>, vector<8x64xf32>, vector<8x64xf32> -> vector<64x64xf32>
    %113 = arith.mulf %111, %112 : vector<64x64xf32>
    %114 = arith.truncf %113 : vector<64x64xf32> to vector<64x64xbf16>
    %c0_51 = arith.constant 0 : index
    %c0_52 = arith.constant 0 : index
    %115 = vector.load %arg4[%c0_51, %c0_52] : memref<8x64xbf16, #tpu.memory_space<vmem>>, vector<8x64xbf16>
    %cst_53 = arith.constant dense<0.000000e+00> : vector<8x64xf32>
    %116 = tpu.matmul %115, %114, %cst_53 {dimension_numbers = #tpu.dot_dimension_numbers<[1], [0], [0], [1], [0, 0, 1, 1], [], []>} : vector<8x64xbf16>, vector<64x64xbf16>, vector<8x64xf32> -> vector<8x64xf32>
    %117 = arith.truncf %116 : vector<8x64xf32> to vector<8x64xbf16>
    %c0_54 = arith.constant 0 : index
    %c2 = arith.constant 2 : index
    %c0_55 = arith.constant 0 : index
    %c0_56 = arith.constant 0 : index
    %c0_57 = arith.constant 0 : index
    %118 = vector.load %arg2[%c0_54, %c2, %c0_55, %c0_56, %c0_57] : memref<1x3x2x1x64xf32, #tpu.memory_space<vmem>>, vector<1x1x1x1x64xf32>
    %119 = vector.shape_cast %118 : vector<1x1x1x1x64xf32> to vector<1x64xf32>
    %c0_58 = arith.constant 0 : index
    %c2_59 = arith.constant 2 : index
    %c1_60 = arith.constant 1 : index
    %c0_61 = arith.constant 0 : index
    %c0_62 = arith.constant 0 : index
    %120 = vector.load %arg2[%c0_58, %c2_59, %c1_60, %c0_61, %c0_62] : memref<1x3x2x1x64xf32, #tpu.memory_space<vmem>>, vector<1x1x1x1x64xf32>
    %121 = vector.shape_cast %120 : vector<1x1x1x1x64xf32> to vector<1x64xf32>
    %122 = arith.addf %3, %119 : vector<1x64xf32>
    %123 = arith.addf %1, %121 : vector<1x64xf32>
    %124 = math.floor %122 : vector<1x64xf32>
    %125 = math.floor %123 : vector<1x64xf32>
    %126 = arith.subf %122, %124 : vector<1x64xf32>
    %127 = arith.subf %123, %125 : vector<1x64xf32>
    %128 = arith.fptosi %124 : vector<1x64xf32> to vector<1x64xi32>
    %129 = arith.fptosi %125 : vector<1x64xf32> to vector<1x64xi32>
    %130 = vector.broadcast %129 : vector<1x64xi32> to vector<8x64xi32>
    %131 = arith.cmpi eq, %4, %130 : vector<8x64xi32>
    %cst_63 = arith.constant 1.000000e+00 : f32
    %132 = vector.broadcast %cst_63 : f32 to vector<1x64xf32>
    %133 = arith.subf %132, %127 : vector<1x64xf32>
    %cst_64 = arith.constant 0.000000e+00 : f32
    %134 = vector.shape_cast %133 : vector<1x64xf32> to vector<1x64xf32>
    %135 = vector.broadcast %134 : vector<1x64xf32> to vector<8x64xf32>
    %136 = vector.broadcast %cst_64 : f32 to vector<8x64xf32>
    %137 = arith.select %131, %135, %136 : vector<8x64xi1>, vector<8x64xf32>
    %c1_i32_65 = arith.constant 1 : i32
    %138 = vector.broadcast %c1_i32_65 : i32 to vector<1x64xi32>
    %139 = arith.addi %129, %138 : vector<1x64xi32>
    %140 = vector.broadcast %139 : vector<1x64xi32> to vector<8x64xi32>
    %141 = arith.cmpi eq, %4, %140 : vector<8x64xi32>
    %cst_66 = arith.constant 0.000000e+00 : f32
    %142 = vector.shape_cast %127 : vector<1x64xf32> to vector<1x64xf32>
    %143 = vector.broadcast %142 : vector<1x64xf32> to vector<8x64xf32>
    %144 = vector.broadcast %cst_66 : f32 to vector<8x64xf32>
    %145 = arith.select %141, %143, %144 : vector<8x64xi1>, vector<8x64xf32>
    %146 = arith.addf %137, %145 : vector<8x64xf32>
    %147 = vector.broadcast %128 : vector<1x64xi32> to vector<8x64xi32>
    %148 = arith.cmpi eq, %5, %147 : vector<8x64xi32>
    %cst_67 = arith.constant 1.000000e+00 : f32
    %149 = vector.broadcast %cst_67 : f32 to vector<1x64xf32>
    %150 = arith.subf %149, %126 : vector<1x64xf32>
    %cst_68 = arith.constant 0.000000e+00 : f32
    %151 = vector.shape_cast %150 : vector<1x64xf32> to vector<1x64xf32>
    %152 = vector.broadcast %151 : vector<1x64xf32> to vector<8x64xf32>
    %153 = vector.broadcast %cst_68 : f32 to vector<8x64xf32>
    %154 = arith.select %148, %152, %153 : vector<8x64xi1>, vector<8x64xf32>
    %c1_i32_69 = arith.constant 1 : i32
    %155 = vector.broadcast %c1_i32_69 : i32 to vector<1x64xi32>
    %156 = arith.addi %128, %155 : vector<1x64xi32>
    %157 = vector.broadcast %156 : vector<1x64xi32> to vector<8x64xi32>
    %158 = arith.cmpi eq, %5, %157 : vector<8x64xi32>
    %cst_70 = arith.constant 0.000000e+00 : f32
    %159 = vector.shape_cast %126 : vector<1x64xf32> to vector<1x64xf32>
    %160 = vector.broadcast %159 : vector<1x64xf32> to vector<8x64xf32>
    %161 = vector.broadcast %cst_70 : f32 to vector<8x64xf32>
    %162 = arith.select %158, %160, %161 : vector<8x64xi1>, vector<8x64xf32>
    %163 = arith.addf %154, %162 : vector<8x64xf32>
    %c0_71 = arith.constant 0 : index
    %c2_72 = arith.constant 2 : index
    %c0_73 = arith.constant 0 : index
    %c0_74 = arith.constant 0 : index
    %164 = vector.load %arg1[%c0_71, %c2_72, %c0_73, %c0_74] : memref<1x3x64x8xbf16, #tpu.memory_space<vmem>>, vector<1x1x64x8xbf16>
    %165 = vector.shape_cast %164 : vector<1x1x64x8xbf16> to vector<64x8xbf16>
    %166 = arith.truncf %146 : vector<8x64xf32> to vector<8x64xbf16>
    %cst_75 = arith.constant dense<0.000000e+00> : vector<64x64xf32>
    %167 = tpu.matmul %165, %166, %cst_75 {dimension_numbers = #tpu.dot_dimension_numbers<[1], [0], [0], [1], [0, 0, 1, 1], [], []>} : vector<64x8xbf16>, vector<8x64xbf16>, vector<64x64xf32> -> vector<64x64xf32>
    %168 = tpu.concatenate %163, %163, %163, %163, %163, %163, %163, %163 in 0 : vector<8x64xf32>, vector<8x64xf32>, vector<8x64xf32>, vector<8x64xf32>, vector<8x64xf32>, vector<8x64xf32>, vector<8x64xf32>, vector<8x64xf32> -> vector<64x64xf32>
    %169 = arith.mulf %167, %168 : vector<64x64xf32>
    %170 = arith.truncf %169 : vector<64x64xf32> to vector<64x64xbf16>
    %c0_76 = arith.constant 0 : index
    %c0_77 = arith.constant 0 : index
    %171 = vector.load %arg4[%c0_76, %c0_77] : memref<8x64xbf16, #tpu.memory_space<vmem>>, vector<8x64xbf16>
    %cst_78 = arith.constant dense<0.000000e+00> : vector<8x64xf32>
    %172 = tpu.matmul %171, %170, %cst_78 {dimension_numbers = #tpu.dot_dimension_numbers<[1], [0], [0], [1], [0, 0, 1, 1], [], []>} : vector<8x64xbf16>, vector<64x64xbf16>, vector<8x64xf32> -> vector<8x64xf32>
    %173 = arith.truncf %172 : vector<8x64xf32> to vector<8x64xbf16>
    %174 = tpu.concatenate %61, %117, %173 in 0 : vector<8x64xbf16>, vector<8x64xbf16>, vector<8x64xbf16> -> vector<24x64xbf16>
    %cst_79 = arith.constant 5.000000e-01 : f32
    %175 = vector.broadcast %cst_79 : f32 to vector<1x64xf32>
    %176 = arith.cmpf ogt, %3, %175 : vector<1x64xf32>
    %177 = arith.extui %176 : vector<1x64xi1> to vector<1x64xi32>
    %178 = arith.sitofp %177 : vector<1x64xi32> to vector<1x64xf32>
    %cst_80 = arith.constant 6.500000e+00 : f32
    %179 = vector.broadcast %cst_80 : f32 to vector<1x64xf32>
    %180 = arith.cmpf olt, %3, %179 : vector<1x64xf32>
    %181 = arith.extui %180 : vector<1x64xi1> to vector<1x64xi32>
    %182 = arith.sitofp %181 : vector<1x64xi32> to vector<1x64xf32>
    %cst_81 = arith.constant 0.000000e+00 : f32
    %183 = vector.broadcast %cst_81 : f32 to vector<16x64xf32>
    %cst_82 = arith.constant 0.000000e+00 : bf16
    %184 = vector.broadcast %cst_82 : bf16 to vector<24x9xbf16>
    %185 = vector.extract_strided_slice %174 {offsets = [0, 0], sizes = [24, 55], strides = [1, 1]} : vector<24x64xbf16> to vector<24x55xbf16>
    %186 = tpu.concatenate %184, %185 in 1 : vector<24x9xbf16>, vector<24x55xbf16> -> vector<24x64xbf16>
    %c0_83 = arith.constant 0 : index
    %c0_84 = arith.constant 0 : index
    %c0_85 = arith.constant 0 : index
    %187 = vector.load %arg5[%c0_83, %c0_84, %c0_85] : memref<9x16x24xbf16, #tpu.memory_space<vmem>>, vector<1x16x24xbf16>
    %188 = vector.shape_cast %187 : vector<1x16x24xbf16> to vector<16x24xbf16>
    %cst_86 = arith.constant dense<0.000000e+00> : vector<16x64xf32>
    %189 = tpu.matmul %188, %186, %cst_86 {dimension_numbers = #tpu.dot_dimension_numbers<[1], [0], [0], [1], [0, 0, 1, 1], [], []>} : vector<16x24xbf16>, vector<24x64xbf16>, vector<16x64xf32> -> vector<16x64xf32>
    %190 = vector.broadcast %178 : vector<1x64xf32> to vector<16x64xf32>
    %191 = arith.mulf %189, %190 : vector<16x64xf32>
    %192 = arith.addf %183, %191 : vector<16x64xf32>
    %cst_87 = arith.constant 0.000000e+00 : bf16
    %193 = vector.broadcast %cst_87 : bf16 to vector<24x8xbf16>
    %194 = vector.extract_strided_slice %174 {offsets = [0, 0], sizes = [24, 56], strides = [1, 1]} : vector<24x64xbf16> to vector<24x56xbf16>
    %195 = tpu.concatenate %193, %194 in 1 : vector<24x8xbf16>, vector<24x56xbf16> -> vector<24x64xbf16>
    %c1_88 = arith.constant 1 : index
    %c0_89 = arith.constant 0 : index
    %c0_90 = arith.constant 0 : index
    %196 = vector.load %arg5[%c1_88, %c0_89, %c0_90] : memref<9x16x24xbf16, #tpu.memory_space<vmem>>, vector<1x16x24xbf16>
    %197 = vector.shape_cast %196 : vector<1x16x24xbf16> to vector<16x24xbf16>
    %cst_91 = arith.constant dense<0.000000e+00> : vector<16x64xf32>
    %198 = tpu.matmul %197, %195, %cst_91 {dimension_numbers = #tpu.dot_dimension_numbers<[1], [0], [0], [1], [0, 0, 1, 1], [], []>} : vector<16x24xbf16>, vector<24x64xbf16>, vector<16x64xf32> -> vector<16x64xf32>
    %199 = arith.addf %192, %198 : vector<16x64xf32>
    %cst_92 = arith.constant 0.000000e+00 : bf16
    %200 = vector.broadcast %cst_92 : bf16 to vector<24x7xbf16>
    %201 = vector.extract_strided_slice %174 {offsets = [0, 0], sizes = [24, 57], strides = [1, 1]} : vector<24x64xbf16> to vector<24x57xbf16>
    %202 = tpu.concatenate %200, %201 in 1 : vector<24x7xbf16>, vector<24x57xbf16> -> vector<24x64xbf16>
    %c2_93 = arith.constant 2 : index
    %c0_94 = arith.constant 0 : index
    %c0_95 = arith.constant 0 : index
    %203 = vector.load %arg5[%c2_93, %c0_94, %c0_95] : memref<9x16x24xbf16, #tpu.memory_space<vmem>>, vector<1x16x24xbf16>
    %204 = vector.shape_cast %203 : vector<1x16x24xbf16> to vector<16x24xbf16>
    %cst_96 = arith.constant dense<0.000000e+00> : vector<16x64xf32>
    %205 = tpu.matmul %204, %202, %cst_96 {dimension_numbers = #tpu.dot_dimension_numbers<[1], [0], [0], [1], [0, 0, 1, 1], [], []>} : vector<16x24xbf16>, vector<24x64xbf16>, vector<16x64xf32> -> vector<16x64xf32>
    %206 = vector.broadcast %182 : vector<1x64xf32> to vector<16x64xf32>
    %207 = arith.mulf %205, %206 : vector<16x64xf32>
    %208 = arith.addf %199, %207 : vector<16x64xf32>
    %cst_97 = arith.constant 0.000000e+00 : bf16
    %209 = vector.broadcast %cst_97 : bf16 to vector<24x1xbf16>
    %210 = vector.extract_strided_slice %174 {offsets = [0, 0], sizes = [24, 63], strides = [1, 1]} : vector<24x64xbf16> to vector<24x63xbf16>
    %211 = tpu.concatenate %209, %210 in 1 : vector<24x1xbf16>, vector<24x63xbf16> -> vector<24x64xbf16>
    %c3 = arith.constant 3 : index
    %c0_98 = arith.constant 0 : index
    %c0_99 = arith.constant 0 : index
    %212 = vector.load %arg5[%c3, %c0_98, %c0_99] : memref<9x16x24xbf16, #tpu.memory_space<vmem>>, vector<1x16x24xbf16>
    %213 = vector.shape_cast %212 : vector<1x16x24xbf16> to vector<16x24xbf16>
    %cst_100 = arith.constant dense<0.000000e+00> : vector<16x64xf32>
    %214 = tpu.matmul %213, %211, %cst_100 {dimension_numbers = #tpu.dot_dimension_numbers<[1], [0], [0], [1], [0, 0, 1, 1], [], []>} : vector<16x24xbf16>, vector<24x64xbf16>, vector<16x64xf32> -> vector<16x64xf32>
    %215 = vector.broadcast %178 : vector<1x64xf32> to vector<16x64xf32>
    %216 = arith.mulf %214, %215 : vector<16x64xf32>
    %217 = arith.addf %208, %216 : vector<16x64xf32>
    %c4 = arith.constant 4 : index
    %c0_101 = arith.constant 0 : index
    %c0_102 = arith.constant 0 : index
    %218 = vector.load %arg5[%c4, %c0_101, %c0_102] : memref<9x16x24xbf16, #tpu.memory_space<vmem>>, vector<1x16x24xbf16>
    %219 = vector.shape_cast %218 : vector<1x16x24xbf16> to vector<16x24xbf16>
    %cst_103 = arith.constant dense<0.000000e+00> : vector<16x64xf32>
    %220 = tpu.matmul %219, %174, %cst_103 {dimension_numbers = #tpu.dot_dimension_numbers<[1], [0], [0], [1], [0, 0, 1, 1], [], []>} : vector<16x24xbf16>, vector<24x64xbf16>, vector<16x64xf32> -> vector<16x64xf32>
    %221 = arith.addf %217, %220 : vector<16x64xf32>
    %cst_104 = arith.constant 0.000000e+00 : bf16
    %222 = vector.broadcast %cst_104 : bf16 to vector<24x1xbf16>
    %223 = vector.extract_strided_slice %174 {offsets = [0, 1], sizes = [24, 63], strides = [1, 1]} : vector<24x64xbf16> to vector<24x63xbf16>
    %224 = tpu.concatenate %223, %222 in 1 : vector<24x63xbf16>, vector<24x1xbf16> -> vector<24x64xbf16>
    %c5 = arith.constant 5 : index
    %c0_105 = arith.constant 0 : index
    %c0_106 = arith.constant 0 : index
    %225 = vector.load %arg5[%c5, %c0_105, %c0_106] : memref<9x16x24xbf16, #tpu.memory_space<vmem>>, vector<1x16x24xbf16>
    %226 = vector.shape_cast %225 : vector<1x16x24xbf16> to vector<16x24xbf16>
    %cst_107 = arith.constant dense<0.000000e+00> : vector<16x64xf32>
    %227 = tpu.matmul %226, %224, %cst_107 {dimension_numbers = #tpu.dot_dimension_numbers<[1], [0], [0], [1], [0, 0, 1, 1], [], []>} : vector<16x24xbf16>, vector<24x64xbf16>, vector<16x64xf32> -> vector<16x64xf32>
    %228 = vector.broadcast %182 : vector<1x64xf32> to vector<16x64xf32>
    %229 = arith.mulf %227, %228 : vector<16x64xf32>
    %230 = arith.addf %221, %229 : vector<16x64xf32>
    %cst_108 = arith.constant 0.000000e+00 : bf16
    %231 = vector.broadcast %cst_108 : bf16 to vector<24x7xbf16>
    %232 = vector.extract_strided_slice %174 {offsets = [0, 7], sizes = [24, 57], strides = [1, 1]} : vector<24x64xbf16> to vector<24x57xbf16>
    %233 = tpu.concatenate %232, %231 in 1 : vector<24x57xbf16>, vector<24x7xbf16> -> vector<24x64xbf16>
    %c6 = arith.constant 6 : index
    %c0_109 = arith.constant 0 : index
    %c0_110 = arith.constant 0 : index
    %234 = vector.load %arg5[%c6, %c0_109, %c0_110] : memref<9x16x24xbf16, #tpu.memory_space<vmem>>, vector<1x16x24xbf16>
    %235 = vector.shape_cast %234 : vector<1x16x24xbf16> to vector<16x24xbf16>
    %cst_111 = arith.constant dense<0.000000e+00> : vector<16x64xf32>
    %236 = tpu.matmul %235, %233, %cst_111 {dimension_numbers = #tpu.dot_dimension_numbers<[1], [0], [0], [1], [0, 0, 1, 1], [], []>} : vector<16x24xbf16>, vector<24x64xbf16>, vector<16x64xf32> -> vector<16x64xf32>
    %237 = vector.broadcast %178 : vector<1x64xf32> to vector<16x64xf32>
    %238 = arith.mulf %236, %237 : vector<16x64xf32>
    %239 = arith.addf %230, %238 : vector<16x64xf32>
    %cst_112 = arith.constant 0.000000e+00 : bf16
    %240 = vector.broadcast %cst_112 : bf16 to vector<24x8xbf16>
    %241 = vector.extract_strided_slice %174 {offsets = [0, 8], sizes = [24, 56], strides = [1, 1]} : vector<24x64xbf16> to vector<24x56xbf16>
    %242 = tpu.concatenate %241, %240 in 1 : vector<24x56xbf16>, vector<24x8xbf16> -> vector<24x64xbf16>
    %c7 = arith.constant 7 : index
    %c0_113 = arith.constant 0 : index
    %c0_114 = arith.constant 0 : index
    %243 = vector.load %arg5[%c7, %c0_113, %c0_114] : memref<9x16x24xbf16, #tpu.memory_space<vmem>>, vector<1x16x24xbf16>
    %244 = vector.shape_cast %243 : vector<1x16x24xbf16> to vector<16x24xbf16>
    %cst_115 = arith.constant dense<0.000000e+00> : vector<16x64xf32>
    %245 = tpu.matmul %244, %242, %cst_115 {dimension_numbers = #tpu.dot_dimension_numbers<[1], [0], [0], [1], [0, 0, 1, 1], [], []>} : vector<16x24xbf16>, vector<24x64xbf16>, vector<16x64xf32> -> vector<16x64xf32>
    %246 = arith.addf %239, %245 : vector<16x64xf32>
    %cst_116 = arith.constant 0.000000e+00 : bf16
    %247 = vector.broadcast %cst_116 : bf16 to vector<24x9xbf16>
    %248 = vector.extract_strided_slice %174 {offsets = [0, 9], sizes = [24, 55], strides = [1, 1]} : vector<24x64xbf16> to vector<24x55xbf16>
    %249 = tpu.concatenate %248, %247 in 1 : vector<24x55xbf16>, vector<24x9xbf16> -> vector<24x64xbf16>
    %c8 = arith.constant 8 : index
    %c0_117 = arith.constant 0 : index
    %c0_118 = arith.constant 0 : index
    %250 = vector.load %arg5[%c8, %c0_117, %c0_118] : memref<9x16x24xbf16, #tpu.memory_space<vmem>>, vector<1x16x24xbf16>
    %251 = vector.shape_cast %250 : vector<1x16x24xbf16> to vector<16x24xbf16>
    %cst_119 = arith.constant dense<0.000000e+00> : vector<16x64xf32>
    %252 = tpu.matmul %251, %249, %cst_119 {dimension_numbers = #tpu.dot_dimension_numbers<[1], [0], [0], [1], [0, 0, 1, 1], [], []>} : vector<16x24xbf16>, vector<24x64xbf16>, vector<16x64xf32> -> vector<16x64xf32>
    %253 = vector.broadcast %182 : vector<1x64xf32> to vector<16x64xf32>
    %254 = arith.mulf %252, %253 : vector<16x64xf32>
    %255 = arith.addf %246, %254 : vector<16x64xf32>
    %c0_120 = arith.constant 0 : index
    %c0_121 = arith.constant 0 : index
    %256 = vector.load %arg6[%c0_120, %c0_121] : memref<16x1xf32, #tpu.memory_space<vmem>>, vector<16x1xf32>
    %257 = vector.broadcast %256 : vector<16x1xf32> to vector<16x64xf32>
    %258 = arith.addf %255, %257 : vector<16x64xf32>
    %cst_122 = arith.constant 0.000000e+00 : f32
    %259 = vector.broadcast %cst_122 : f32 to vector<16x64xf32>
    %260 = arith.cmpf ogt, %258, %259 : vector<16x64xf32>
    %cst_123 = arith.constant 1.000000e-01 : f32
    %261 = vector.broadcast %cst_123 : f32 to vector<16x64xf32>
    %262 = arith.mulf %261, %258 : vector<16x64xf32>
    %263 = arith.select %260, %258, %262 : vector<16x64xi1>, vector<16x64xf32>
    %264 = arith.truncf %263 : vector<16x64xf32> to vector<16x64xbf16>
    %cst_124 = arith.constant 0.000000e+00 : f32
    %265 = vector.broadcast %cst_124 : f32 to vector<8x64xf32>
    %cst_125 = arith.constant 0.000000e+00 : bf16
    %266 = vector.broadcast %cst_125 : bf16 to vector<16x9xbf16>
    %267 = vector.extract_strided_slice %264 {offsets = [0, 0], sizes = [16, 55], strides = [1, 1]} : vector<16x64xbf16> to vector<16x55xbf16>
    %268 = tpu.concatenate %266, %267 in 1 : vector<16x9xbf16>, vector<16x55xbf16> -> vector<16x64xbf16>
    %c0_126 = arith.constant 0 : index
    %c0_127 = arith.constant 0 : index
    %c0_128 = arith.constant 0 : index
    %269 = vector.load %arg7[%c0_126, %c0_127, %c0_128] : memref<9x8x16xbf16, #tpu.memory_space<vmem>>, vector<1x8x16xbf16>
    %270 = vector.shape_cast %269 : vector<1x8x16xbf16> to vector<8x16xbf16>
    %cst_129 = arith.constant dense<0.000000e+00> : vector<8x64xf32>
    %271 = tpu.matmul %270, %268, %cst_129 {dimension_numbers = #tpu.dot_dimension_numbers<[1], [0], [0], [1], [0, 0, 1, 1], [], []>} : vector<8x16xbf16>, vector<16x64xbf16>, vector<8x64xf32> -> vector<8x64xf32>
    %272 = vector.broadcast %178 : vector<1x64xf32> to vector<8x64xf32>
    %273 = arith.mulf %271, %272 : vector<8x64xf32>
    %274 = arith.addf %265, %273 : vector<8x64xf32>
    %cst_130 = arith.constant 0.000000e+00 : bf16
    %275 = vector.broadcast %cst_130 : bf16 to vector<16x8xbf16>
    %276 = vector.extract_strided_slice %264 {offsets = [0, 0], sizes = [16, 56], strides = [1, 1]} : vector<16x64xbf16> to vector<16x56xbf16>
    %277 = tpu.concatenate %275, %276 in 1 : vector<16x8xbf16>, vector<16x56xbf16> -> vector<16x64xbf16>
    %c1_131 = arith.constant 1 : index
    %c0_132 = arith.constant 0 : index
    %c0_133 = arith.constant 0 : index
    %278 = vector.load %arg7[%c1_131, %c0_132, %c0_133] : memref<9x8x16xbf16, #tpu.memory_space<vmem>>, vector<1x8x16xbf16>
    %279 = vector.shape_cast %278 : vector<1x8x16xbf16> to vector<8x16xbf16>
    %cst_134 = arith.constant dense<0.000000e+00> : vector<8x64xf32>
    %280 = tpu.matmul %279, %277, %cst_134 {dimension_numbers = #tpu.dot_dimension_numbers<[1], [0], [0], [1], [0, 0, 1, 1], [], []>} : vector<8x16xbf16>, vector<16x64xbf16>, vector<8x64xf32> -> vector<8x64xf32>
    %281 = arith.addf %274, %280 : vector<8x64xf32>
    %cst_135 = arith.constant 0.000000e+00 : bf16
    %282 = vector.broadcast %cst_135 : bf16 to vector<16x7xbf16>
    %283 = vector.extract_strided_slice %264 {offsets = [0, 0], sizes = [16, 57], strides = [1, 1]} : vector<16x64xbf16> to vector<16x57xbf16>
    %284 = tpu.concatenate %282, %283 in 1 : vector<16x7xbf16>, vector<16x57xbf16> -> vector<16x64xbf16>
    %c2_136 = arith.constant 2 : index
    %c0_137 = arith.constant 0 : index
    %c0_138 = arith.constant 0 : index
    %285 = vector.load %arg7[%c2_136, %c0_137, %c0_138] : memref<9x8x16xbf16, #tpu.memory_space<vmem>>, vector<1x8x16xbf16>
    %286 = vector.shape_cast %285 : vector<1x8x16xbf16> to vector<8x16xbf16>
    %cst_139 = arith.constant dense<0.000000e+00> : vector<8x64xf32>
    %287 = tpu.matmul %286, %284, %cst_139 {dimension_numbers = #tpu.dot_dimension_numbers<[1], [0], [0], [1], [0, 0, 1, 1], [], []>} : vector<8x16xbf16>, vector<16x64xbf16>, vector<8x64xf32> -> vector<8x64xf32>
    %288 = vector.broadcast %182 : vector<1x64xf32> to vector<8x64xf32>
    %289 = arith.mulf %287, %288 : vector<8x64xf32>
    %290 = arith.addf %281, %289 : vector<8x64xf32>
    %cst_140 = arith.constant 0.000000e+00 : bf16
    %291 = vector.broadcast %cst_140 : bf16 to vector<16x1xbf16>
    %292 = vector.extract_strided_slice %264 {offsets = [0, 0], sizes = [16, 63], strides = [1, 1]} : vector<16x64xbf16> to vector<16x63xbf16>
    %293 = tpu.concatenate %291, %292 in 1 : vector<16x1xbf16>, vector<16x63xbf16> -> vector<16x64xbf16>
    %c3_141 = arith.constant 3 : index
    %c0_142 = arith.constant 0 : index
    %c0_143 = arith.constant 0 : index
    %294 = vector.load %arg7[%c3_141, %c0_142, %c0_143] : memref<9x8x16xbf16, #tpu.memory_space<vmem>>, vector<1x8x16xbf16>
    %295 = vector.shape_cast %294 : vector<1x8x16xbf16> to vector<8x16xbf16>
    %cst_144 = arith.constant dense<0.000000e+00> : vector<8x64xf32>
    %296 = tpu.matmul %295, %293, %cst_144 {dimension_numbers = #tpu.dot_dimension_numbers<[1], [0], [0], [1], [0, 0, 1, 1], [], []>} : vector<8x16xbf16>, vector<16x64xbf16>, vector<8x64xf32> -> vector<8x64xf32>
    %297 = vector.broadcast %178 : vector<1x64xf32> to vector<8x64xf32>
    %298 = arith.mulf %296, %297 : vector<8x64xf32>
    %299 = arith.addf %290, %298 : vector<8x64xf32>
    %c4_145 = arith.constant 4 : index
    %c0_146 = arith.constant 0 : index
    %c0_147 = arith.constant 0 : index
    %300 = vector.load %arg7[%c4_145, %c0_146, %c0_147] : memref<9x8x16xbf16, #tpu.memory_space<vmem>>, vector<1x8x16xbf16>
    %301 = vector.shape_cast %300 : vector<1x8x16xbf16> to vector<8x16xbf16>
    %cst_148 = arith.constant dense<0.000000e+00> : vector<8x64xf32>
    %302 = tpu.matmul %301, %264, %cst_148 {dimension_numbers = #tpu.dot_dimension_numbers<[1], [0], [0], [1], [0, 0, 1, 1], [], []>} : vector<8x16xbf16>, vector<16x64xbf16>, vector<8x64xf32> -> vector<8x64xf32>
    %303 = arith.addf %299, %302 : vector<8x64xf32>
    %cst_149 = arith.constant 0.000000e+00 : bf16
    %304 = vector.broadcast %cst_149 : bf16 to vector<16x1xbf16>
    %305 = vector.extract_strided_slice %264 {offsets = [0, 1], sizes = [16, 63], strides = [1, 1]} : vector<16x64xbf16> to vector<16x63xbf16>
    %306 = tpu.concatenate %305, %304 in 1 : vector<16x63xbf16>, vector<16x1xbf16> -> vector<16x64xbf16>
    %c5_150 = arith.constant 5 : index
    %c0_151 = arith.constant 0 : index
    %c0_152 = arith.constant 0 : index
    %307 = vector.load %arg7[%c5_150, %c0_151, %c0_152] : memref<9x8x16xbf16, #tpu.memory_space<vmem>>, vector<1x8x16xbf16>
    %308 = vector.shape_cast %307 : vector<1x8x16xbf16> to vector<8x16xbf16>
    %cst_153 = arith.constant dense<0.000000e+00> : vector<8x64xf32>
    %309 = tpu.matmul %308, %306, %cst_153 {dimension_numbers = #tpu.dot_dimension_numbers<[1], [0], [0], [1], [0, 0, 1, 1], [], []>} : vector<8x16xbf16>, vector<16x64xbf16>, vector<8x64xf32> -> vector<8x64xf32>
    %310 = vector.broadcast %182 : vector<1x64xf32> to vector<8x64xf32>
    %311 = arith.mulf %309, %310 : vector<8x64xf32>
    %312 = arith.addf %303, %311 : vector<8x64xf32>
    %cst_154 = arith.constant 0.000000e+00 : bf16
    %313 = vector.broadcast %cst_154 : bf16 to vector<16x7xbf16>
    %314 = vector.extract_strided_slice %264 {offsets = [0, 7], sizes = [16, 57], strides = [1, 1]} : vector<16x64xbf16> to vector<16x57xbf16>
    %315 = tpu.concatenate %314, %313 in 1 : vector<16x57xbf16>, vector<16x7xbf16> -> vector<16x64xbf16>
    %c6_155 = arith.constant 6 : index
    %c0_156 = arith.constant 0 : index
    %c0_157 = arith.constant 0 : index
    %316 = vector.load %arg7[%c6_155, %c0_156, %c0_157] : memref<9x8x16xbf16, #tpu.memory_space<vmem>>, vector<1x8x16xbf16>
    %317 = vector.shape_cast %316 : vector<1x8x16xbf16> to vector<8x16xbf16>
    %cst_158 = arith.constant dense<0.000000e+00> : vector<8x64xf32>
    %318 = tpu.matmul %317, %315, %cst_158 {dimension_numbers = #tpu.dot_dimension_numbers<[1], [0], [0], [1], [0, 0, 1, 1], [], []>} : vector<8x16xbf16>, vector<16x64xbf16>, vector<8x64xf32> -> vector<8x64xf32>
    %319 = vector.broadcast %178 : vector<1x64xf32> to vector<8x64xf32>
    %320 = arith.mulf %318, %319 : vector<8x64xf32>
    %321 = arith.addf %312, %320 : vector<8x64xf32>
    %cst_159 = arith.constant 0.000000e+00 : bf16
    %322 = vector.broadcast %cst_159 : bf16 to vector<16x8xbf16>
    %323 = vector.extract_strided_slice %264 {offsets = [0, 8], sizes = [16, 56], strides = [1, 1]} : vector<16x64xbf16> to vector<16x56xbf16>
    %324 = tpu.concatenate %323, %322 in 1 : vector<16x56xbf16>, vector<16x8xbf16> -> vector<16x64xbf16>
    %c7_160 = arith.constant 7 : index
    %c0_161 = arith.constant 0 : index
    %c0_162 = arith.constant 0 : index
    %325 = vector.load %arg7[%c7_160, %c0_161, %c0_162] : memref<9x8x16xbf16, #tpu.memory_space<vmem>>, vector<1x8x16xbf16>
    %326 = vector.shape_cast %325 : vector<1x8x16xbf16> to vector<8x16xbf16>
    %cst_163 = arith.constant dense<0.000000e+00> : vector<8x64xf32>
    %327 = tpu.matmul %326, %324, %cst_163 {dimension_numbers = #tpu.dot_dimension_numbers<[1], [0], [0], [1], [0, 0, 1, 1], [], []>} : vector<8x16xbf16>, vector<16x64xbf16>, vector<8x64xf32> -> vector<8x64xf32>
    %328 = arith.addf %321, %327 : vector<8x64xf32>
    %cst_164 = arith.constant 0.000000e+00 : bf16
    %329 = vector.broadcast %cst_164 : bf16 to vector<16x9xbf16>
    %330 = vector.extract_strided_slice %264 {offsets = [0, 9], sizes = [16, 55], strides = [1, 1]} : vector<16x64xbf16> to vector<16x55xbf16>
    %331 = tpu.concatenate %330, %329 in 1 : vector<16x55xbf16>, vector<16x9xbf16> -> vector<16x64xbf16>
    %c8_165 = arith.constant 8 : index
    %c0_166 = arith.constant 0 : index
    %c0_167 = arith.constant 0 : index
    %332 = vector.load %arg7[%c8_165, %c0_166, %c0_167] : memref<9x8x16xbf16, #tpu.memory_space<vmem>>, vector<1x8x16xbf16>
    %333 = vector.shape_cast %332 : vector<1x8x16xbf16> to vector<8x16xbf16>
    %cst_168 = arith.constant dense<0.000000e+00> : vector<8x64xf32>
    %334 = tpu.matmul %333, %331, %cst_168 {dimension_numbers = #tpu.dot_dimension_numbers<[1], [0], [0], [1], [0, 0, 1, 1], [], []>} : vector<8x16xbf16>, vector<16x64xbf16>, vector<8x64xf32> -> vector<8x64xf32>
    %335 = vector.broadcast %182 : vector<1x64xf32> to vector<8x64xf32>
    %336 = arith.mulf %334, %335 : vector<8x64xf32>
    %337 = arith.addf %328, %336 : vector<8x64xf32>
    %c0_169 = arith.constant 0 : index
    %c0_170 = arith.constant 0 : index
    %338 = vector.load %arg8[%c0_169, %c0_170] : memref<8x1xf32, #tpu.memory_space<vmem>>, vector<8x1xf32>
    %339 = vector.broadcast %338 : vector<8x1xf32> to vector<8x64xf32>
    %340 = arith.addf %337, %339 : vector<8x64xf32>
    %c0_171 = arith.constant 0 : index
    %c0_172 = arith.constant 0 : index
    %c0_173 = arith.constant 0 : index
    %341 = vector.load %arg9[%c0_171, %c0_172, %c0_173] : memref<1x8x64xf32, #tpu.memory_space<vmem>>, vector<1x8x64xf32>
    %342 = vector.shape_cast %341 : vector<1x8x64xf32> to vector<8x64xf32>
    %343 = vector.shape_cast %340 : vector<8x64xf32> to vector<1x8x64xf32>
    tpu.vector_store %arg9[%c0_171, %c0_172, %c0_173], %343 {strides = array<i32>} : memref<1x8x64xf32, #tpu.memory_space<vmem>>, vector<1x8x64xf32>,
    return
  }
  func.func @transform_0(%arg0: i32) -> (i32, i32, i32, i32) {
    %c0_i32 = arith.constant 0 : i32
    %c0_i32_0 = arith.constant 0 : i32
    %c0_i32_1 = arith.constant 0 : i32
    %c0_i32_2 = arith.constant 0 : i32
    return %arg0, %c0_i32, %c0_i32_0, %c0_i32_1 : i32, i32, i32, i32
  }
  func.func @transform_1(%arg0: i32) -> (i32, i32, i32, i32, i32) {
    %c0_i32 = arith.constant 0 : i32
    %c0_i32_0 = arith.constant 0 : i32
    %c0_i32_1 = arith.constant 0 : i32
    %c0_i32_2 = arith.constant 0 : i32
    %c0_i32_3 = arith.constant 0 : i32
    return %arg0, %c0_i32, %c0_i32_0, %c0_i32_1, %c0_i32_2 : i32, i32, i32, i32, i32
  }
  func.func @transform_2(%arg0: i32) -> (i32, i32, i32) {
    %c0_i32 = arith.constant 0 : i32
    %c0_i32_0 = arith.constant 0 : i32
    %c0_i32_1 = arith.constant 0 : i32
    %c0_i32_2 = arith.constant 0 : i32
    return %c0_i32, %c0_i32_0, %c0_i32_1 : i32, i32, i32
  }
  func.func @transform_3(%arg0: i32) -> (i32, i32) {
    %c0_i32 = arith.constant 0 : i32
    %c0_i32_0 = arith.constant 0 : i32
    %c0_i32_1 = arith.constant 0 : i32
    return %c0_i32, %c0_i32_0 : i32, i32
  }
  func.func @transform_4(%arg0: i32) -> (i32, i32, i32) {
    %c0_i32 = arith.constant 0 : i32
    %c0_i32_0 = arith.constant 0 : i32
    %c0_i32_1 = arith.constant 0 : i32
    %c0_i32_2 = arith.constant 0 : i32
    return %c0_i32, %c0_i32_0, %c0_i32_1 : i32, i32, i32
  }
  func.func @transform_5(%arg0: i32) -> (i32, i32) {
    %c0_i32 = arith.constant 0 : i32
    %c0_i32_0 = arith.constant 0 : i32
    %c0_i32_1 = arith.constant 0 : i32
    return %c0_i32, %c0_i32_0 : i32, i32
  }
  func.func @transform_6(%arg0: i32) -> (i32, i32, i32) {
    %c0_i32 = arith.constant 0 : i32
    %c0_i32_0 = arith.constant 0 : i32
    %c0_i32_1 = arith.constant 0 : i32
    %c0_i32_2 = arith.constant 0 : i32
    return %c0_i32, %c0_i32_0, %c0_i32_1 : i32, i32, i32
  }
  func.func @transform_7(%arg0: i32) -> (i32, i32) {
    %c0_i32 = arith.constant 0 : i32
    %c0_i32_0 = arith.constant 0 : i32
    %c0_i32_1 = arith.constant 0 : i32
    return %c0_i32, %c0_i32_0 : i32, i32
  }
  func.func @transform_8(%arg0: i32) -> (i32, i32, i32) {
    %c0_i32 = arith.constant 0 : i32
    %c0_i32_0 = arith.constant 0 : i32
    %c0_i32_1 = arith.constant 0 : i32
    return %arg0, %c0_i32, %c0_i32_0 : i32, i32, i32
  }
}

</mosaic_0001>

<llo_original>
// kernel: tpu_custom_call.1
$region0: #{tpu_custom_call.1}
  #allocation0 [shape = 'u32[]', space=smem, size = 0x4, offset = 0x4, fixed_abs, tag = 'smem constant byte address 0x4 - core index']
  #allocation1 [shape = 'u32[144,128]{1,0:T(1,128)}', space=vmem, size = 0x12000, scoped, tag = 'internal scratch']
  %s0 = inlined_call_operand.vmem [shape: bf16[2,3,64,8], index: 0, kind: input, shape index: {}]
  %s1 = inlined_call_operand.vmem [shape: f32[2,3,2,1,64], index: 1, kind: input, shape index: {}]
  %s2 = inlined_call_operand.vmem [shape: f32[2,1,64], index: 2, kind: input, shape index: {}]
  %s3 = inlined_call_operand.vmem [shape: bf16[8,64], index: 3, kind: input, shape index: {}]
  %s4 = inlined_call_operand.vmem [shape: bf16[9,16,24], index: 4, kind: input, shape index: {}]
  %s5 = inlined_call_operand.vmem [shape: f32[16,1], index: 5, kind: input, shape index: {}]
  %s6 = inlined_call_operand.vmem [shape: bf16[9,8,16], index: 6, kind: input, shape index: {}]
  %s7 = inlined_call_operand.vmem [shape: f32[8,1], index: 7, kind: input, shape index: {}]
  %s8 = inlined_call_operand.hbm [shape: f32[2,8,64], index: 8, kind: output, shape index: {}]
  %s9 = sld [smem:[#allocation0]]
  $region65: #{tpu_custom_call.1} parent=0
    _
  %s11 = ssub.s32 1, %s9
  %s12 = scalar_select 0, %s11, %s9
  $region1: #{tpu_custom_call.1} parent=0
    #allocation2 [shape = 'u8[8192]{0}', space=vmem, size = 0x2000, scoped, tag = 'output window, operand 0']
    #allocation3 [shape = 's32[2]{0}', space=sflag, size = 0x8, scoped, tag = 'scoped memory for tpu_custom_call.1']
    %13 = vsyncpa [#allocation3], 0
    %s14 = scalar_lea.sflag [#allocation3], 1
    %15 = vsyncpa %s14, 0
    loop: start=0, step=1, limit=4
    $region2: #{tpu_custom_call.1} parent=1 // loop_pre_header
      _
    $region3: #{tpu_custom_call.1} parent=1 // loop_header
      %s17 = sphi 0, %s21
      %p18 = scmp.ge.s32.totalorder %s17, 4
      %s27 = sphi 0, %s29
      %s30 = sphi 0, %s27
      %s31 = sphi 0, %s30
      %s47 = sphi 0, %s31
      %s53 = sphi 0, %s55
      %s56 = sphi 0, %s53
      %s57 = sphi 0, %s56
      %s73 = sphi 0, %s57
      %s77 = sphi 0, %s77
      %s79 = sphi 0, %s77
      %s80 = sphi 0, %s79
      %s94 = sphi 0, %s80
      %s98 = sphi 0, %s98
      %s100 = sphi 0, %s98
      %s101 = sphi 0, %s100
      %s115 = sphi 0, %s101
      %s119 = sphi 0, %s119
      %s121 = sphi 0, %s119
      %s122 = sphi 0, %s121
      %s136 = sphi 0, %s122
      %s140 = sphi 0, %s140
      %s142 = sphi 0, %s140
      %s143 = sphi 0, %s142
      %s157 = sphi 0, %s143
      %s161 = sphi 0, %s161
      %s163 = sphi 0, %s161
      %s164 = sphi 0, %s163
      %s178 = sphi 0, %s164
      %s182 = sphi 0, %s182
      %s184 = sphi 0, %s182
      %s185 = sphi 0, %s184
      %s199 = sphi 0, %s185
      %s205 = sphi 0, %s207
      %s208 = sphi 0, %s205
      %s209 = sphi 0, %s208
      %s225 = sphi 0, %s209
    $region4: #{tpu_custom_call.1} parent=1 // loop_header_branch
      %20 = sbr.rel (%p18) target = $region8
    $region5: #{tpu_custom_call.1} parent=1 // loop_body
      %s22 = ssub.s32 %s17, 1
      %s23 = ssub.s32 %s17, 2
      %s24 = sadd.s32 %s17, 1
      %s25 = ssub.s32 %s17, %s24
      %p26 = scmp.eq.s32.totalorder %s25, 0
      %s28 = sadd.s32 %s27, 1
      %s29 = scalar_select %p26, %s27, %s28
      %p32 = pneg %p26
      %p33 = scmp.eq.s32.totalorder %s17, 1
      %p34 = por %p32, %p33
      %p35 = scmp.ne.s32.totalorder %s27, %s30
      %p36 = scmp.eq.s32.totalorder %s17, 0
      %p37 = por %p35, %p36
      %p38 = scmp.ne.s32.totalorder %s27, %s30
      %p39 = scmp.eq.s32.totalorder %s22, 1
      %p40 = por %p38, %p39
      %p41 = scmp.ne.s32.totalorder %s30, %s31
      %p42 = scmp.eq.s32.totalorder %s22, 0
      %p43 = por %p41, %p42
      %p44 = scmp.ne.s32.totalorder %s30, %s31
      %p45 = scmp.eq.s32.totalorder %s23, 1
      %p46 = por %p44, %p45
      %p48 = scmp.ne.s32.totalorder %s31, %s47
      %p49 = scmp.eq.s32.totalorder %s23, 0
      %p50 = por %p48, %p49
      %s51 = ssub.s32 %s17, %s24
      %p52 = scmp.eq.s32.totalorder %s51, 0
      %s54 = sadd.s32 %s53, 1
      %s55 = scalar_select %p52, %s53, %s54
      %p58 = pneg %p52
      %p59 = scmp.eq.s32.totalorder %s17, 1
      %p60 = por %p58, %p59
      %p61 = scmp.ne.s32.totalorder %s53, %s56
      %p62 = scmp.eq.s32.totalorder %s17, 0
      %p63 = por %p61, %p62
      %p64 = scmp.ne.s32.totalorder %s53, %s56
      %p65 = scmp.eq.s32.totalorder %s22, 1
      %p66 = por %p64, %p65
      %p67 = scmp.ne.s32.totalorder %s56, %s57
      %p68 = scmp.eq.s32.totalorder %s22, 0
      %p69 = por %p67, %p68
      %p70 = scmp.ne.s32.totalorder %s56, %s57
      %p71 = scmp.eq.s32.totalorder %s23, 1
      %p72 = por %p70, %p71
      %p74 = scmp.ne.s32.totalorder %s57, %s73
      %p75 = scmp.eq.s32.totalorder %s23, 0
      %p76 = por %p74, %p75
      %s78 = sadd.s32 %s77, 1
      %p81 = scmp.eq.s32.totalorder %s17, 1
      %p82 = scmp.ne.s32.totalorder %s77, %s79
      %p83 = scmp.eq.s32.totalorder %s17, 0
      %p84 = por %p82, %p83
      %p85 = scmp.ne.s32.totalorder %s77, %s79
      %p86 = scmp.eq.s32.totalorder %s22, 1
      %p87 = por %p85, %p86
      %p88 = scmp.ne.s32.totalorder %s79, %s80
      %p89 = scmp.eq.s32.totalorder %s22, 0
      %p90 = por %p88, %p89
      %p91 = scmp.ne.s32.totalorder %s79, %s80
      %p92 = scmp.eq.s32.totalorder %s23, 1
      %p93 = por %p91, %p92
      %p95 = scmp.ne.s32.totalorder %s80, %s94
      %p96 = scmp.eq.s32.totalorder %s23, 0
      %p97 = por %p95, %p96
      %s99 = sadd.s32 %s98, 1
      %p102 = scmp.eq.s32.totalorder %s17, 1
      %p103 = scmp.ne.s32.totalorder %s98, %s100
      %p104 = scmp.eq.s32.totalorder %s17, 0
      %p105 = por %p103, %p104
      %p106 = scmp.ne.s32.totalorder %s98, %s100
      %p107 = scmp.eq.s32.totalorder %s22, 1
      %p108 = por %p106, %p107
      %p109 = scmp.ne.s32.totalorder %s100, %s101
      %p110 = scmp.eq.s32.totalorder %s22, 0
      %p111 = por %p109, %p110
      %p112 = scmp.ne.s32.totalorder %s100, %s101
      %p113 = scmp.eq.s32.totalorder %s23, 1
      %p114 = por %p112, %p113
      %p116 = scmp.ne.s32.totalorder %s101, %s115
      %p117 = scmp.eq.s32.totalorder %s23, 0
      %p118 = por %p116, %p117
      %s120 = sadd.s32 %s119, 1
      %p123 = scmp.eq.s32.totalorder %s17, 1
      %p124 = scmp.ne.s32.totalorder %s119, %s121
      %p125 = scmp.eq.s32.totalorder %s17, 0
      %p126 = por %p124, %p125
      %p127 = scmp.ne.s32.totalorder %s119, %s121
      %p128 = scmp.eq.s32.totalorder %s22, 1
      %p129 = por %p127, %p128
      %p130 = scmp.ne.s32.totalorder %s121, %s122
      %p131 = scmp.eq.s32.totalorder %s22, 0
      %p132 = por %p130, %p131
      %p133 = scmp.ne.s32.totalorder %s121, %s122
      %p134 = scmp.eq.s32.totalorder %s23, 1
      %p135 = por %p133, %p134
      %p137 = scmp.ne.s32.totalorder %s122, %s136
      %p138 = scmp.eq.s32.totalorder %s23, 0
      %p139 = por %p137, %p138
      %s141 = sadd.s32 %s140, 1
      %p144 = scmp.eq.s32.totalorder %s17, 1
      %p145 = scmp.ne.s32.totalorder %s140, %s142
      %p146 = scmp.eq.s32.totalorder %s17, 0
      %p147 = por %p145, %p146
      %p148 = scmp.ne.s32.totalorder %s140, %s142
      %p149 = scmp.eq.s32.totalorder %s22, 1
      %p150 = por %p148, %p149
      %p151 = scmp.ne.s32.totalorder %s142, %s143
      %p152 = scmp.eq.s32.totalorder %s22, 0
      %p153 = por %p151, %p152
      %p154 = scmp.ne.s32.totalorder %s142, %s143
      %p155 = scmp.eq.s32.totalorder %s23, 1
      %p156 = por %p154, %p155
      %p158 = scmp.ne.s32.totalorder %s143, %s157
      %p159 = scmp.eq.s32.totalorder %s23, 0
      %p160 = por %p158, %p159
      %s162 = sadd.s32 %s161, 1
      %p165 = scmp.eq.s32.totalorder %s17, 1
      %p166 = scmp.ne.s32.totalorder %s161, %s163
      %p167 = scmp.eq.s32.totalorder %s17, 0
      %p168 = por %p166, %p167
      %p169 = scmp.ne.s32.totalorder %s161, %s163
      %p170 = scmp.eq.s32.totalorder %s22, 1
      %p171 = por %p169, %p170
      %p172 = scmp.ne.s32.totalorder %s163, %s164
      %p173 = scmp.eq.s32.totalorder %s22, 0
      %p174 = por %p172, %p173
      %p175 = scmp.ne.s32.totalorder %s163, %s164
      %p176 = scmp.eq.s32.totalorder %s23, 1
      %p177 = por %p175, %p176
      %p179 = scmp.ne.s32.totalorder %s164, %s178
      %p180 = scmp.eq.s32.totalorder %s23, 0
      %p181 = por %p179, %p180
      %s183 = sadd.s32 %s182, 1
      %p186 = scmp.eq.s32.totalorder %s17, 1
      %p187 = scmp.ne.s32.totalorder %s182, %s184
      %p188 = scmp.eq.s32.totalorder %s17, 0
      %p189 = por %p187, %p188
      %p190 = scmp.ne.s32.totalorder %s182, %s184
      %p191 = scmp.eq.s32.totalorder %s22, 1
      %p192 = por %p190, %p191
      %p193 = scmp.ne.s32.totalorder %s184, %s185
      %p194 = scmp.eq.s32.totalorder %s22, 0
      %p195 = por %p193, %p194
      %p196 = scmp.ne.s32.totalorder %s184, %s185
      %p197 = scmp.eq.s32.totalorder %s23, 1
      %p198 = por %p196, %p197
      %p200 = scmp.ne.s32.totalorder %s185, %s199
      %p201 = scmp.eq.s32.totalorder %s23, 0
      %p202 = por %p200, %p201
      %s203 = ssub.s32 %s17, %s24
      %p204 = scmp.eq.s32.totalorder %s203, 0
      %s206 = sadd.s32 %s205, 1
      %s207 = scalar_select %p204, %s205, %s206
      %p210 = pneg %p204
      %p211 = scmp.eq.s32.totalorder %s17, 1
      %p212 = por %p210, %p211
      %p213 = scmp.ne.s32.totalorder %s205, %s208
      %p214 = scmp.eq.s32.totalorder %s17, 0
      %p215 = por %p213, %p214
      %p216 = scmp.ne.s32.totalorder %s205, %s208
      %p217 = scmp.eq.s32.totalorder %s22, 1
      %p218 = por %p216, %p217
      %p219 = scmp.ne.s32.totalorder %s208, %s209
      %p220 = scmp.eq.s32.totalorder %s22, 0
      %p221 = por %p219, %p220
      %p222 = scmp.ne.s32.totalorder %s208, %s209
      %p223 = scmp.eq.s32.totalorder %s23, 1
      %p224 = por %p222, %p223
      %p226 = scmp.ne.s32.totalorder %s209, %s225
      %p227 = scmp.eq.s32.totalorder %s23, 0
      %p228 = por %p226, %p227
      %p229 = scmp.le.s32.totalorder 1, %s17
      %p230 = scmp.lt.s32.totalorder %s17, 3
      %p231 = pnand %p229, %p230
      %p232 = pneg %p231
      // Predicated region
      $region9: #{tpu_custom_call.1} parent=5 // pred_check
        _
      $region10: #{tpu_custom_call.1} parent=5 // pred_check_branch
        %234 = sbr.rel (%p231) target = $region12
      $region11: #{tpu_custom_call.1} parent=5 // pred_region
        %s235 = ssub.s32 %s17, 1
        // Predicated region
        $region13: #{tpu_custom_call.1} parent=11 // pred_check
          %p236 = pneg %p90
        $region14: #{tpu_custom_call.1} parent=11 // pred_check_branch
          %238 = sbr.rel (%p236) target = $region16
        $region15: #{tpu_custom_call.1} parent=11 // pred_region
          _
        $region16: #{tpu_custom_call.1} parent=11 // pred_fallthru
          _
        // Predicated region
        $region17: #{tpu_custom_call.1} parent=11 // pred_check
          %p239 = pneg %p111
        $region18: #{tpu_custom_call.1} parent=11 // pred_check_branch
          %241 = sbr.rel (%p239) target = $region20
        $region19: #{tpu_custom_call.1} parent=11 // pred_region
          _
        $region20: #{tpu_custom_call.1} parent=11 // pred_fallthru
          _
        // Predicated region
        $region21: #{tpu_custom_call.1} parent=11 // pred_check
          %p242 = pneg %p132
        $region22: #{tpu_custom_call.1} parent=11 // pred_check_branch
          %244 = sbr.rel (%p242) target = $region24
        $region23: #{tpu_custom_call.1} parent=11 // pred_region
          _
        $region24: #{tpu_custom_call.1} parent=11 // pred_fallthru
          _
        // Predicated region
        $region25: #{tpu_custom_call.1} parent=11 // pred_check
          %p245 = pneg %p153
        $region26: #{tpu_custom_call.1} parent=11 // pred_check_branch
          %247 = sbr.rel (%p245) target = $region28
        $region27: #{tpu_custom_call.1} parent=11 // pred_region
          _
        $region28: #{tpu_custom_call.1} parent=11 // pred_fallthru
          _
        // Predicated region
        $region29: #{tpu_custom_call.1} parent=11 // pred_check
          %p248 = pneg %p174
        $region30: #{tpu_custom_call.1} parent=11 // pred_check_branch
          %250 = sbr.rel (%p248) target = $region32
        $region31: #{tpu_custom_call.1} parent=11 // pred_region
          _
        $region32: #{tpu_custom_call.1} parent=11 // pred_fallthru
          _
        // Predicated region
        $region33: #{tpu_custom_call.1} parent=11 // pred_check
          %p251 = pneg %p195
        $region34: #{tpu_custom_call.1} parent=11 // pred_check_branch
          %253 = sbr.rel (%p251) target = $region36
        $region35: #{tpu_custom_call.1} parent=11 // pred_region
          _
        $region36: #{tpu_custom_call.1} parent=11 // pred_fallthru
          _
      $region12: #{tpu_custom_call.1} parent=5 // pred_fallthru
        _
      %p254 = scmp.lt.s32.totalorder %s17, 2
      // Predicated region
      $region37: #{tpu_custom_call.1} parent=5 // pred_check
        %p255 = pneg %p254
      $region38: #{tpu_custom_call.1} parent=5 // pred_check_branch
        %257 = sbr.rel (%p255) target = $region40
      $region39: #{tpu_custom_call.1} parent=5 // pred_region
        // Predicated region
        $region41: #{tpu_custom_call.1} parent=39 // pred_check
          %p258 = pneg %p37
        $region42: #{tpu_custom_call.1} parent=39 // pred_check_branch
          %260 = sbr.rel (%p258) target = $region44
        $region43: #{tpu_custom_call.1} parent=39 // pred_region
          %p261 = scmp.lt.s32.totalorder %s17, 1
          %s262 = scalar_select %p261, %s17, 1
          %s263 = smul.addr %s262, 24
          %s264 = smul.addr %s263, 4
          %s265 = scalar_lea.vmem %s0, %s264
        $region44: #{tpu_custom_call.1} parent=39 // pred_fallthru
          _
        // Predicated region
        $region45: #{tpu_custom_call.1} parent=39 // pred_check
          %p266 = pneg %p63
        $region46: #{tpu_custom_call.1} parent=39 // pred_check_branch
          %268 = sbr.rel (%p266) target = $region48
        $region47: #{tpu_custom_call.1} parent=39 // pred_region
          %p269 = scmp.lt.s32.totalorder %s17, 1
          %s270 = scalar_select %p269, %s17, 1
          %s271 = smul.addr %s270, 6
          %s272 = scalar_lea.vmem %s1, %s271
        $region48: #{tpu_custom_call.1} parent=39 // pred_fallthru
          _
      $region40: #{tpu_custom_call.1} parent=5 // pred_fallthru
        _
      %p273 = scmp.le.s32.totalorder 1, %s17
      %p274 = scmp.lt.s32.totalorder %s17, 3
      %p275 = pnand %p273, %p274
      %p276 = pneg %p275
      // Predicated region
      $region49: #{tpu_custom_call.1} parent=5 // pred_check
        _
      $region50: #{tpu_custom_call.1} parent=5 // pred_check_branch
        %278 = sbr.rel (%p275) target = $region52
      $region51: #{tpu_custom_call.1} parent=5 // pred_region
        %s279 = ssub.s32 %s17, 1
        %p280 = scmp.lt.s32.totalorder %s22, 1
        %s281 = scalar_select %p280, %s22, 1
        %s282 = smul.addr %s281, 24
        %s283 = smul.addr %s282, 4
        %s284 = scalar_lea.vmem %s0, %s283
        %p285 = pneg %p43
        %p286 = pneg %p40
        %p287 = scmp.lt.s32.totalorder %s22, 1
        %s288 = scalar_select %p287, %s22, 1
        %s289 = smul.addr %s288, 6
        %s290 = scalar_lea.vmem %s1, %s289
        %p291 = pneg %p69
        %p292 = pneg %p66
        %p293 = pneg %p90
        %p294 = pneg %p87
        %p295 = pneg %p111
        %p296 = pneg %p108
        %p297 = pneg %p132
        %p298 = pneg %p129
        %p299 = pneg %p153
        %p300 = pneg %p150
        %p301 = pneg %p174
        %p302 = pneg %p171
        %p303 = pneg %p195
        %p304 = pneg %p192
        %p305 = pneg %p221
        %p306 = pneg %p218
        %s307 = sand.u32 %s208, 1
        %s308 = scalar_lea.sflag [#allocation3], %s307
        %s309 = sand.u32 %s208, 1
        %s310 = smul.addr %s309, 8
        %s311 = scalar_lea.vmem [#allocation2], %s310
        %p312 = scmp.lt.s32.totalorder %s22, 1
        %s313 = scalar_select %p312, %s22, 1
        %s314 = smul.addr %s313, 24
        %s315 = smul.addr %s314, 4
        %s316 = scalar_lea.vmem %s0, %s315
        %p317 = scmp.lt.s32.totalorder %s22, 1
        %s318 = scalar_select %p317, %s22, 1
        %s319 = smul.addr %s318, 6
        %s320 = scalar_lea.vmem %s1, %s319
        %v322 = vld [vmem:[%s2] sm:$0x1]
        %s323 = scalar_lea.vmem %s2, 1
        %v324 = vld [vmem:[%s323] sm:$0x1]
        %v325 = vlaneseq
        %v326 = vshrl.u32 %v325, 7
        %v327 = vld [vmem:[%s320] sm:$0x1]
        %s328 = scalar_lea.vmem %s320, 1
        %v329 = vld [vmem:[%s328] sm:$0x1]
        %v330 = vadd.f32 %v324, %v327
        %v331 = vadd.f32 %v322, %v329
        %v332 = vfloor.f32 %v330
        %v333 = vfloor.f32 %v331
        %v334 = vsub.f32 %v330, %v332
        %v335 = vsub.f32 %v331, %v333
        %v336 = vcvt.f32.s32.to.zero.pseudo %v332
        %v337 = vcvt.f32.s32.to.zero.pseudo %v333
        %v338 = vlaneseq
        %v339 = vshrl.u32 %v338, 7
        %v340 = vsub.s32 0, %v339
        %v341 = vrot.slane %v337, %v340
        %vm342 = vcmp.eq.s32.totalorder %v326, %v341
        %v343 = vsub.f32 1.0, %v335
        %v345 = vlaneseq
        %v346 = vshrl.u32 %v345, 7
        %v347 = vsub.s32 0, %v346
        %v348 = vrot.slane %v343, %v347
        %v350 = vsel %vm342, %v348, 0.0
        %v351 = vadd.s32 %v337, 1
        %v352 = vlaneseq
        %v353 = vshrl.u32 %v352, 7
        %v354 = vsub.s32 0, %v353
        %v355 = vrot.slane %v351, %v354
        %vm356 = vcmp.eq.s32.totalorder %v326, %v355
        %v358 = vlaneseq
        %v359 = vshrl.u32 %v358, 7
        %v360 = vsub.s32 0, %v359
        %v361 = vrot.slane %v335, %v360
        %v363 = vsel %vm356, %v361, 0.0
        %v364 = vadd.f32 %v350, %v363
        %v365 = vlaneseq
        %v366 = vshrl.u32 %v365, 7
        %v367 = vsub.s32 0, %v366
        %v368 = vrot.slane %v336, %v367
        %vm369 = vcmp.eq.s32.totalorder %v326, %v368
        %v370 = vsub.f32 1.0, %v334
        %v372 = vlaneseq
        %v373 = vshrl.u32 %v372, 7
        %v374 = vsub.s32 0, %v373
        %v375 = vrot.slane %v370, %v374
        %v377 = vsel %vm369, %v375, 0.0
        %v378 = vadd.s32 %v336, 1
        %v379 = vlaneseq
        %v380 = vshrl.u32 %v379, 7
        %v381 = vsub.s32 0, %v380
        %v382 = vrot.slane %v378, %v381
        %vm383 = vcmp.eq.s32.totalorder %v326, %v382
        %v385 = vlaneseq
        %v386 = vshrl.u32 %v385, 7
        %v387 = vsub.s32 0, %v386
        %v388 = vrot.slane %v334, %v387
        %v390 = vsel %vm383, %v388, 0.0
        %v391 = vadd.f32 %v377, %v390
        %v392 = vld [vmem:[%s316] sm:$0xf]
        %v393 = vld [vmem:[%s316 + $0x4] sm:$0xf]
        %v394 = vld [vmem:[%s316 + $0x8] sm:$0xf]
        %v395 = vld [vmem:[%s316 + $0xc] sm:$0xf]
        %v396 = vld [vmem:[%s316 + $0x10] sm:$0xf]
        %v397 = vld [vmem:[%s316 + $0x14] sm:$0xf]
        %v398 = vld [vmem:[%s316 + $0x18] sm:$0xf]
        %v399 = vld [vmem:[%s316 + $0x1c] sm:$0xf]
        %v400 = vpack.c.bf16 %v364, %v364
        %v409 = vunpack.c.l.b16 %v392
        %v410 = vunpack.c.l.b16 %v393
        %v411 = vunpack.c.l.b16 %v394
        %v412 = vunpack.c.l.b16 %v395
        %v413 = vunpack.c.l.b16 %v396
        %v414 = vunpack.c.l.b16 %v397
        %v415 = vunpack.c.l.b16 %v398
        %v416 = vunpack.c.l.b16 %v399
        %v417 = vpack.c.b16 %v410, %v409
        %v418 = vpack.c.b16 %v412, %v411
        %v419 = vpack.c.b16 %v414, %v413
        %v420 = vpack.c.b16 %v416, %v415
        %vm421 = vcmask 64512
        %v423 = vsel %vm421, %v417, 0
        %v426 = vsel %vm421, %v418, 0
        %v429 = vsel %vm421, %v419, 0
        %v432 = vsel %vm421, %v420, 0
        %vm434 = vcmask 1043456
        %v436 = vsel %vm434, %v400, 0
        %438 = vmatprep.subr.bf16.mxu0 0
        %439 = vmatpush1.bf16.msra.mxu0 %v436
        %440 = vmatprep.subr.bf16.mxu0 0
        %441 = vmatpush1.bf16.msra.mxu0 0
        %442 = vmatprep.subr.bf16.mxu0 0
        %443 = vmatpush1.bf16.msra.mxu0 0
        %444 = vmatprep.subr.bf16.mxu0 0
        %445 = vmatpush1.bf16.msra.mxu0 0
        %446 = vmatprep.subr.bf16.mxu0 0
        %447 = vmatpush1.bf16.msra.mxu0 0
        %448 = vmatprep.subr.bf16.mxu0 0
        %449 = vmatpush1.bf16.msra.mxu0 0
        %450 = vmatprep.subr.bf16.mxu0 0
        %451 = vmatpush1.bf16.msra.mxu0 0
        %452 = vmatprep.subr.bf16.mxu0 0
        %453 = vmatpush1.bf16.msra.mxu0 0
        %454 = vmatprep.subr.bf16.mxu0 0
        %455 = vmatpush1.bf16.msra.mxu0 0
        %456 = vmatprep.subr.bf16.mxu0 0
        %457 = vmatpush1.bf16.msra.mxu0 0
        %458 = vmatprep.subr.bf16.mxu0 0
        %459 = vmatpush1.bf16.msra.mxu0 0
        %460 = vmatprep.subr.bf16.mxu0 0
        %461 = vmatpush1.bf16.msra.mxu0 0
        %462 = vmatprep.subr.bf16.mxu0 0
        %463 = vmatpush1.bf16.msra.mxu0 0
        %464 = vmatprep.subr.bf16.mxu0 0
        %465 = vmatpush1.bf16.msra.mxu0 0
        %466 = vmatprep.subr.bf16.mxu0 0
        %467 = vmatpush1.bf16.msra.mxu0 0
        %468 = vmatprep.subr.bf16.mxu0 0
        %469 = vmatpush1.bf16.msra.mxu0 0
        %470 = vmatprep.mubr.bf16.mxu0 0
        %471 = vmatmul.mubr.bf16.gmra.mrb[0].mxu0 %v423
        %v472 = vpop.f32.mrb[0].mxu0
        %v473 = vadd.f32 0.0, %v472
        %v474 = vpop.f32.mrb[0].mxu0
        %v475 = vpop.f32.mrb[0].mxu0
        %v476 = vadd.f32 0.0, %v475
        %v477 = vpop.f32.mrb[0].mxu0
        %478 = vmatprep.mubr.bf16.mxu0 0
        %479 = vmatmul.mubr.bf16.gmra.mrb[0].mxu0 %v426
        %v480 = vpop.f32.mrb[0].mxu0
        %v481 = vadd.f32 0.0, %v480
        %v482 = vpop.f32.mrb[0].mxu0
        %v483 = vpop.f32.mrb[0].mxu0
        %v484 = vadd.f32 0.0, %v483
        %v485 = vpop.f32.mrb[0].mxu0
        %486 = vmatprep.mubr.bf16.mxu0 0
        %487 = vmatmul.mubr.bf16.gmra.mrb[0].mxu0 %v429
        %v488 = vpop.f32.mrb[0].mxu0
        %v489 = vadd.f32 0.0, %v488
        %v490 = vpop.f32.mrb[0].mxu0
        %v491 = vpop.f32.mrb[0].mxu0
        %v492 = vadd.f32 0.0, %v491
        %v493 = vpop.f32.mrb[0].mxu0
        %494 = vmatprep.mubr.bf16.mxu0 0
        %495 = vmatmul.mubr.bf16.gmra.mrb[0].mxu0 %v432
        %v496 = vpop.f32.mrb[0].mxu0
        %v497 = vadd.f32 0.0, %v496
        %v498 = vpop.f32.mrb[0].mxu0
        %v499 = vpop.f32.mrb[0].mxu0
        %v500 = vadd.f32 0.0, %v499
        %v501 = vpop.f32.mrb[0].mxu0
        %502 = vdwg.mxu0
        %v503 = vmul.f32 %v473, %v391
        %v504 = vmul.f32 %v476, %v391
        %v505 = vmul.f32 %v481, %v391
        %v506 = vmul.f32 %v484, %v391
        %v507 = vmul.f32 %v489, %v391
        %v508 = vmul.f32 %v492, %v391
        %v509 = vmul.f32 %v497, %v391
        %v510 = vmul.f32 %v500, %v391
        %v511 = vpack.c.bf16 %v504, %v503
        %v512 = vpack.c.bf16 %v506, %v505
        %v513 = vpack.c.bf16 %v508, %v507
        %v514 = vpack.c.bf16 %v510, %v509
        %v515 = vld [vmem:[%s3] sm:$0xf]
        %vm516 = vcmask 523264
        %v518 = vsel %vm516, %v515, 0
        %520 = vmatprep.subr.bf16.mxu0 0
        %521 = vmatpush1.bf16.msra.mxu0 %v511
        %522 = vmatprep.subr.bf16.mxu0 0
        %523 = vmatpush1.bf16.msra.mxu0 %v512
        %524 = vmatprep.subr.bf16.mxu0 0
        %525 = vmatpush1.bf16.msra.mxu0 %v513
        %526 = vmatprep.subr.bf16.mxu0 0
        %527 = vmatpush1.bf16.msra.mxu0 %v514
        %528 = vmatprep.subr.bf16.mxu0 0
        %529 = vmatpush1.bf16.msra.mxu0 0
        %530 = vmatprep.subr.bf16.mxu0 0
        %531 = vmatpush1.bf16.msra.mxu0 0
        %532 = vmatprep.subr.bf16.mxu0 0
        %533 = vmatpush1.bf16.msra.mxu0 0
        %534 = vmatprep.subr.bf16.mxu0 0
        %535 = vmatpush1.bf16.msra.mxu0 0
        %536 = vmatprep.subr.bf16.mxu0 0
        %537 = vmatpush1.bf16.msra.mxu0 0
        %538 = vmatprep.subr.bf16.mxu0 0
        %539 = vmatpush1.bf16.msra.mxu0 0
        %540 = vmatprep.subr.bf16.mxu0 0
        %541 = vmatpush1.bf16.msra.mxu0 0
        %542 = vmatprep.subr.bf16.mxu0 0
        %543 = vmatpush1.bf16.msra.mxu0 0
        %544 = vmatprep.subr.bf16.mxu0 0
        %545 = vmatpush1.bf16.msra.mxu0 0
        %546 = vmatprep.subr.bf16.mxu0 0
        %547 = vmatpush1.bf16.msra.mxu0 0
        %548 = vmatprep.subr.bf16.mxu0 0
        %549 = vmatpush1.bf16.msra.mxu0 0
        %550 = vmatprep.subr.bf16.mxu0 0
        %551 = vmatpush1.bf16.msra.mxu0 0
        %552 = vmatprep.mubr.bf16.mxu0 0
        %553 = vmatmul.mubr.bf16.gmra.mrb[0].mxu0 %v518
        %v554 = vpop.f32.mrb[0].mxu0
        %v555 = vadd.f32 0.0, %v554
        %v556 = vpop.f32.mrb[0].mxu0
        %v557 = vpop.f32.mrb[0].mxu0
        %v558 = vpop.f32.mrb[0].mxu0
        %559 = vdwg.mxu0
        %v560 = vpack.c.bf16 %v555, %v555
        %s561 = scalar_lea.vmem %s320, 2
        %v562 = vld [vmem:[%s561] sm:$0x1]
        %s563 = scalar_lea.vmem %s320, 3
        %v564 = vld [vmem:[%s563] sm:$0x1]
        %v565 = vadd.f32 %v324, %v562
        %v566 = vadd.f32 %v322, %v564
        %v567 = vfloor.f32 %v565
        %v568 = vfloor.f32 %v566
        %v569 = vsub.f32 %v565, %v567
        %v570 = vsub.f32 %v566, %v568
        %v571 = vcvt.f32.s32.to.zero.pseudo %v567
        %v572 = vcvt.f32.s32.to.zero.pseudo %v568
        %v573 = vlaneseq
        %v574 = vshrl.u32 %v573, 7
        %v575 = vsub.s32 0, %v574
        %v576 = vrot.slane %v572, %v575
        %vm577 = vcmp.eq.s32.totalorder %v326, %v576
        %v578 = vsub.f32 1.0, %v570
        %v580 = vlaneseq
        %v581 = vshrl.u32 %v580, 7
        %v582 = vsub.s32 0, %v581
        %v583 = vrot.slane %v578, %v582
        %v585 = vsel %vm577, %v583, 0.0
        %v586 = vadd.s32 %v572, 1
        %v587 = vlaneseq
        %v588 = vshrl.u32 %v587, 7
        %v589 = vsub.s32 0, %v588
        %v590 = vrot.slane %v586, %v589
        %vm591 = vcmp.eq.s32.totalorder %v326, %v590
        %v593 = vlaneseq
        %v594 = vshrl.u32 %v593, 7
        %v595 = vsub.s32 0, %v594
        %v596 = vrot.slane %v570, %v595
        %v598 = vsel %vm591, %v596, 0.0
        %v599 = vadd.f32 %v585, %v598
        %v600 = vlaneseq
        %v601 = vshrl.u32 %v600, 7
        %v602 = vsub.s32 0, %v601
        %v603 = vrot.slane %v571, %v602
        %vm604 = vcmp.eq.s32.totalorder %v326, %v603
        %v605 = vsub.f32 1.0, %v569
        %v607 = vlaneseq
        %v608 = vshrl.u32 %v607, 7
        %v609 = vsub.s32 0, %v608
        %v610 = vrot.slane %v605, %v609
        %v612 = vsel %vm604, %v610, 0.0
        %v613 = vadd.s32 %v571, 1
        %v614 = vlaneseq
        %v615 = vshrl.u32 %v614, 7
        %v616 = vsub.s32 0, %v615
        %v617 = vrot.slane %v613, %v616
        %vm618 = vcmp.eq.s32.totalorder %v326, %v617
        %v620 = vlaneseq
        %v621 = vshrl.u32 %v620, 7
        %v622 = vsub.s32 0, %v621
        %v623 = vrot.slane %v569, %v622
        %v625 = vsel %vm618, %v623, 0.0
        %v626 = vadd.f32 %v612, %v625
        %s627 = scalar_lea.vmem %s316, 32
        %v628 = vld [vmem:[%s627] sm:$0xf]
        %v629 = vld [vmem:[%s627 + $0x4] sm:$0xf]
        %v630 = vld [vmem:[%s627 + $0x8] sm:$0xf]
        %v631 = vld [vmem:[%s627 + $0xc] sm:$0xf]
        %v632 = vld [vmem:[%s627 + $0x10] sm:$0xf]
        %v633 = vld [vmem:[%s627 + $0x14] sm:$0xf]
        %v634 = vld [vmem:[%s627 + $0x18] sm:$0xf]
        %v635 = vld [vmem:[%s627 + $0x1c] sm:$0xf]
        %v636 = vpack.c.bf16 %v599, %v599
        %v645 = vunpack.c.l.b16 %v628
        %v646 = vunpack.c.l.b16 %v629
        %v647 = vunpack.c.l.b16 %v630
        %v648 = vunpack.c.l.b16 %v631
        %v649 = vunpack.c.l.b16 %v632
        %v650 = vunpack.c.l.b16 %v633
        %v651 = vunpack.c.l.b16 %v634
        %v652 = vunpack.c.l.b16 %v635
        %v653 = vpack.c.b16 %v646, %v645
        %v654 = vpack.c.b16 %v648, %v647
        %v655 = vpack.c.b16 %v650, %v649
        %v656 = vpack.c.b16 %v652, %v651
        %v658 = vsel %vm421, %v653, 0
        %v661 = vsel %vm421, %v654, 0
        %v664 = vsel %vm421, %v655, 0
        %v667 = vsel %vm421, %v656, 0
        %v670 = vsel %vm434, %v636, 0
        %672 = vmatprep.subr.bf16.mxu0 0
        %673 = vmatpush1.bf16.msra.mxu0 %v670
        %674 = vmatprep.subr.bf16.mxu0 0
        %675 = vmatpush1.bf16.msra.mxu0 0
        %676 = vmatprep.subr.bf16.mxu0 0
        %677 = vmatpush1.bf16.msra.mxu0 0
        %678 = vmatprep.subr.bf16.mxu0 0
        %679 = vmatpush1.bf16.msra.mxu0 0
        %680 = vmatprep.subr.bf16.mxu0 0
        %681 = vmatpush1.bf16.msra.mxu0 0
        %682 = vmatprep.subr.bf16.mxu0 0
        %683 = vmatpush1.bf16.msra.mxu0 0
        %684 = vmatprep.subr.bf16.mxu0 0
        %685 = vmatpush1.bf16.msra.mxu0 0
        %686 = vmatprep.subr.bf16.mxu0 0
        %687 = vmatpush1.bf16.msra.mxu0 0
        %688 = vmatprep.subr.bf16.mxu0 0
        %689 = vmatpush1.bf16.msra.mxu0 0
        %690 = vmatprep.subr.bf16.mxu0 0
        %691 = vmatpush1.bf16.msra.mxu0 0
        %692 = vmatprep.subr.bf16.mxu0 0
        %693 = vmatpush1.bf16.msra.mxu0 0
        %694 = vmatprep.subr.bf16.mxu0 0
        %695 = vmatpush1.bf16.msra.mxu0 0
        %696 = vmatprep.subr.bf16.mxu0 0
        %697 = vmatpush1.bf16.msra.mxu0 0
        %698 = vmatprep.subr.bf16.mxu0 0
        %699 = vmatpush1.bf16.msra.mxu0 0
        %700 = vmatprep.subr.bf16.mxu0 0
        %701 = vmatpush1.bf16.msra.mxu0 0
        %702 = vmatprep.subr.bf16.mxu0 0
        %703 = vmatpush1.bf16.msra.mxu0 0
        %704 = vmatprep.mubr.bf16.mxu0 0
        %705 = vmatmul.mubr.bf16.gmra.mrb[0].mxu0 %v658
        %v706 = vpop.f32.mrb[0].mxu0
        %v707 = vadd.f32 0.0, %v706
        %v708 = vpop.f32.mrb[0].mxu0
        %v709 = vpop.f32.mrb[0].mxu0
        %v710 = vadd.f32 0.0, %v709
        %v711 = vpop.f32.mrb[0].mxu0
        %712 = vmatprep.mubr.bf16.mxu0 0
        %713 = vmatmul.mubr.bf16.gmra.mrb[0].mxu0 %v661
        %v714 = vpop.f32.mrb[0].mxu0
        %v715 = vadd.f32 0.0, %v714
        %v716 = vpop.f32.mrb[0].mxu0
        %v717 = vpop.f32.mrb[0].mxu0
        %v718 = vadd.f32 0.0, %v717
        %v719 = vpop.f32.mrb[0].mxu0
        %720 = vmatprep.mubr.bf16.mxu0 0
        %721 = vmatmul.mubr.bf16.gmra.mrb[0].mxu0 %v664
        %v722 = vpop.f32.mrb[0].mxu0
        %v723 = vadd.f32 0.0, %v722
        %v724 = vpop.f32.mrb[0].mxu0
        %v725 = vpop.f32.mrb[0].mxu0
        %v726 = vadd.f32 0.0, %v725
        %v727 = vpop.f32.mrb[0].mxu0
        %728 = vmatprep.mubr.bf16.mxu0 0
        %729 = vmatmul.mubr.bf16.gmra.mrb[0].mxu0 %v667
        %v730 = vpop.f32.mrb[0].mxu0
        %v731 = vadd.f32 0.0, %v730
        %v732 = vpop.f32.mrb[0].mxu0
        %v733 = vpop.f32.mrb[0].mxu0
        %v734 = vadd.f32 0.0, %v733
        %v735 = vpop.f32.mrb[0].mxu0
        %736 = vdwg.mxu0
        %v737 = vmul.f32 %v707, %v626
        %v738 = vmul.f32 %v710, %v626
        %v739 = vmul.f32 %v715, %v626
        %v740 = vmul.f32 %v718, %v626
        %v741 = vmul.f32 %v723, %v626
        %v742 = vmul.f32 %v726, %v626
        %v743 = vmul.f32 %v731, %v626
        %v744 = vmul.f32 %v734, %v626
        %v745 = vpack.c.bf16 %v738, %v737
        %v746 = vpack.c.bf16 %v740, %v739
        %v747 = vpack.c.bf16 %v742, %v741
        %v748 = vpack.c.bf16 %v744, %v743
        %749 = vmatprep.subr.bf16.mxu0 0
        %750 = vmatpush1.bf16.msra.mxu0 %v745
        %751 = vmatprep.subr.bf16.mxu0 0
        %752 = vmatpush1.bf16.msra.mxu0 %v746
        %753 = vmatprep.subr.bf16.mxu0 0
        %754 = vmatpush1.bf16.msra.mxu0 %v747
        %755 = vmatprep.subr.bf16.mxu0 0
        %756 = vmatpush1.bf16.msra.mxu0 %v748
        %757 = vmatprep.subr.bf16.mxu0 0
        %758 = vmatpush1.bf16.msra.mxu0 0
        %759 = vmatprep.subr.bf16.mxu0 0
        %760 = vmatpush1.bf16.msra.mxu0 0
        %761 = vmatprep.subr.bf16.mxu0 0
        %762 = vmatpush1.bf16.msra.mxu0 0
        %763 = vmatprep.subr.bf16.mxu0 0
        %764 = vmatpush1.bf16.msra.mxu0 0
        %765 = vmatprep.subr.bf16.mxu0 0
        %766 = vmatpush1.bf16.msra.mxu0 0
        %767 = vmatprep.subr.bf16.mxu0 0
        %768 = vmatpush1.bf16.msra.mxu0 0
        %769 = vmatprep.subr.bf16.mxu0 0
        %770 = vmatpush1.bf16.msra.mxu0 0
        %771 = vmatprep.subr.bf16.mxu0 0
        %772 = vmatpush1.bf16.msra.mxu0 0
        %773 = vmatprep.subr.bf16.mxu0 0
        %774 = vmatpush1.bf16.msra.mxu0 0
        %775 = vmatprep.subr.bf16.mxu0 0
        %776 = vmatpush1.bf16.msra.mxu0 0
        %777 = vmatprep.subr.bf16.mxu0 0
        %778 = vmatpush1.bf16.msra.mxu0 0
        %779 = vmatprep.subr.bf16.mxu0 0
        %780 = vmatpush1.bf16.msra.mxu0 0
        %781 = vmatprep.mubr.bf16.mxu0 0
        %782 = vmatmul.mubr.bf16.gmra.mrb[0].mxu0 %v518
        %v783 = vpop.f32.mrb[0].mxu0
        %v784 = vadd.f32 0.0, %v783
        %v785 = vpop.f32.mrb[0].mxu0
        %v786 = vpop.f32.mrb[0].mxu0
        %v787 = vpop.f32.mrb[0].mxu0
        %788 = vdwg.mxu0
        %v789 = vpack.c.bf16 %v784, %v784
        %s790 = scalar_lea.vmem %s320, 4
        %v791 = vld [vmem:[%s790] sm:$0x1]
        %s792 = scalar_lea.vmem %s320, 5
        %v793 = vld [vmem:[%s792] sm:$0x1]
        %v794 = vadd.f32 %v324, %v791
        %v795 = vadd.f32 %v322, %v793
        %v796 = vfloor.f32 %v794
        %v797 = vfloor.f32 %v795
        %v798 = vsub.f32 %v794, %v796
        %v799 = vsub.f32 %v795, %v797
        %v800 = vcvt.f32.s32.to.zero.pseudo %v796
        %v801 = vcvt.f32.s32.to.zero.pseudo %v797
        %v802 = vlaneseq
        %v803 = vshrl.u32 %v802, 7
        %v804 = vsub.s32 0, %v803
        %v805 = vrot.slane %v801, %v804
        %vm806 = vcmp.eq.s32.totalorder %v326, %v805
        %v807 = vsub.f32 1.0, %v799
        %v809 = vlaneseq
        %v810 = vshrl.u32 %v809, 7
        %v811 = vsub.s32 0, %v810
        %v812 = vrot.slane %v807, %v811
        %v814 = vsel %vm806, %v812, 0.0
        %v815 = vadd.s32 %v801, 1
        %v816 = vlaneseq
        %v817 = vshrl.u32 %v816, 7
        %v818 = vsub.s32 0, %v817
        %v819 = vrot.slane %v815, %v818
        %vm820 = vcmp.eq.s32.totalorder %v326, %v819
        %v822 = vlaneseq
        %v823 = vshrl.u32 %v822, 7
        %v824 = vsub.s32 0, %v823
        %v825 = vrot.slane %v799, %v824
        %v827 = vsel %vm820, %v825, 0.0
        %v828 = vadd.f32 %v814, %v827
        %v829 = vlaneseq
        %v830 = vshrl.u32 %v829, 7
        %v831 = vsub.s32 0, %v830
        %v832 = vrot.slane %v800, %v831
        %vm833 = vcmp.eq.s32.totalorder %v326, %v832
        %v834 = vsub.f32 1.0, %v798
        %v836 = vlaneseq
        %v837 = vshrl.u32 %v836, 7
        %v838 = vsub.s32 0, %v837
        %v839 = vrot.slane %v834, %v838
        %v841 = vsel %vm833, %v839, 0.0
        %v842 = vadd.s32 %v800, 1
        %v843 = vlaneseq
        %v844 = vshrl.u32 %v843, 7
        %v845 = vsub.s32 0, %v844
        %v846 = vrot.slane %v842, %v845
        %vm847 = vcmp.eq.s32.totalorder %v326, %v846
        %v849 = vlaneseq
        %v850 = vshrl.u32 %v849, 7
        %v851 = vsub.s32 0, %v850
        %v852 = vrot.slane %v798, %v851
        %v854 = vsel %vm847, %v852, 0.0
        %v855 = vadd.f32 %v841, %v854
        %s856 = scalar_lea.vmem %s316, 64
        %v857 = vld [vmem:[%s856] sm:$0xf]
        %v858 = vld [vmem:[%s856 + $0x4] sm:$0xf]
        %v859 = vld [vmem:[%s856 + $0x8] sm:$0xf]
        %v860 = vld [vmem:[%s856 + $0xc] sm:$0xf]
        %v861 = vld [vmem:[%s856 + $0x10] sm:$0xf]
        %v862 = vld [vmem:[%s856 + $0x14] sm:$0xf]
        %v863 = vld [vmem:[%s856 + $0x18] sm:$0xf]
        %v864 = vld [vmem:[%s856 + $0x1c] sm:$0xf]
        %v865 = vpack.c.bf16 %v828, %v828
        %v874 = vunpack.c.l.b16 %v857
        %v875 = vunpack.c.l.b16 %v858
        %v876 = vunpack.c.l.b16 %v859
        %v877 = vunpack.c.l.b16 %v860
        %v878 = vunpack.c.l.b16 %v861
        %v879 = vunpack.c.l.b16 %v862
        %v880 = vunpack.c.l.b16 %v863
        %v881 = vunpack.c.l.b16 %v864
        %v882 = vpack.c.b16 %v875, %v874
        %v883 = vpack.c.b16 %v877, %v876
        %v884 = vpack.c.b16 %v879, %v878
        %v885 = vpack.c.b16 %v881, %v880
        %v887 = vsel %vm421, %v882, 0
        %v890 = vsel %vm421, %v883, 0
        %v893 = vsel %vm421, %v884, 0
        %v896 = vsel %vm421, %v885, 0
        %v899 = vsel %vm434, %v865, 0
        %901 = vmatprep.subr.bf16.mxu0 0
        %902 = vmatpush1.bf16.msra.mxu0 %v899
        %903 = vmatprep.subr.bf16.mxu0 0
        %904 = vmatpush1.bf16.msra.mxu0 0
        %905 = vmatprep.subr.bf16.mxu0 0
        %906 = vmatpush1.bf16.msra.mxu0 0
        %907 = vmatprep.subr.bf16.mxu0 0
        %908 = vmatpush1.bf16.msra.mxu0 0
        %909 = vmatprep.subr.bf16.mxu0 0
        %910 = vmatpush1.bf16.msra.mxu0 0
        %911 = vmatprep.subr.bf16.mxu0 0
        %912 = vmatpush1.bf16.msra.mxu0 0
        %913 = vmatprep.subr.bf16.mxu0 0
        %914 = vmatpush1.bf16.msra.mxu0 0
        %915 = vmatprep.subr.bf16.mxu0 0
        %916 = vmatpush1.bf16.msra.mxu0 0
        %917 = vmatprep.subr.bf16.mxu0 0
        %918 = vmatpush1.bf16.msra.mxu0 0
        %919 = vmatprep.subr.bf16.mxu0 0
        %920 = vmatpush1.bf16.msra.mxu0 0
        %921 = vmatprep.subr.bf16.mxu0 0
        %922 = vmatpush1.bf16.msra.mxu0 0
        %923 = vmatprep.subr.bf16.mxu0 0
        %924 = vmatpush1.bf16.msra.mxu0 0
        %925 = vmatprep.subr.bf16.mxu0 0
        %926 = vmatpush1.bf16.msra.mxu0 0
        %927 = vmatprep.subr.bf16.mxu0 0
        %928 = vmatpush1.bf16.msra.mxu0 0
        %929 = vmatprep.subr.bf16.mxu0 0
        %930 = vmatpush1.bf16.msra.mxu0 0
        %931 = vmatprep.subr.bf16.mxu0 0
        %932 = vmatpush1.bf16.msra.mxu0 0
        %933 = vmatprep.mubr.bf16.mxu0 0
        %934 = vmatmul.mubr.bf16.gmra.mrb[0].mxu0 %v887
        %v935 = vpop.f32.mrb[0].mxu0
        %v936 = vadd.f32 0.0, %v935
        %v937 = vpop.f32.mrb[0].mxu0
        %v938 = vpop.f32.mrb[0].mxu0
        %v939 = vadd.f32 0.0, %v938
        %v940 = vpop.f32.mrb[0].mxu0
        %941 = vmatprep.mubr.bf16.mxu0 0
        %942 = vmatmul.mubr.bf16.gmra.mrb[0].mxu0 %v890
        %v943 = vpop.f32.mrb[0].mxu0
        %v944 = vadd.f32 0.0, %v943
        %v945 = vpop.f32.mrb[0].mxu0
        %v946 = vpop.f32.mrb[0].mxu0
        %v947 = vadd.f32 0.0, %v946
        %v948 = vpop.f32.mrb[0].mxu0
        %949 = vmatprep.mubr.bf16.mxu0 0
        %950 = vmatmul.mubr.bf16.gmra.mrb[0].mxu0 %v893
        %v951 = vpop.f32.mrb[0].mxu0
        %v952 = vadd.f32 0.0, %v951
        %v953 = vpop.f32.mrb[0].mxu0
        %v954 = vpop.f32.mrb[0].mxu0
        %v955 = vadd.f32 0.0, %v954
        %v956 = vpop.f32.mrb[0].mxu0
        %957 = vmatprep.mubr.bf16.mxu0 0
        %958 = vmatmul.mubr.bf16.gmra.mrb[0].mxu0 %v896
        %v959 = vpop.f32.mrb[0].mxu0
        %v960 = vadd.f32 0.0, %v959
        %v961 = vpop.f32.mrb[0].mxu0
        %v962 = vpop.f32.mrb[0].mxu0
        %v963 = vadd.f32 0.0, %v962
        %v964 = vpop.f32.mrb[0].mxu0
        %965 = vdwg.mxu0
        %v966 = vmul.f32 %v936, %v855
        %v967 = vmul.f32 %v939, %v855
        %v968 = vmul.f32 %v944, %v855
        %v969 = vmul.f32 %v947, %v855
        %v970 = vmul.f32 %v952, %v855
        %v971 = vmul.f32 %v955, %v855
        %v972 = vmul.f32 %v960, %v855
        %v973 = vmul.f32 %v963, %v855
        %v974 = vpack.c.bf16 %v967, %v966
        %v975 = vpack.c.bf16 %v969, %v968
        %v976 = vpack.c.bf16 %v971, %v970
        %v977 = vpack.c.bf16 %v973, %v972
        %978 = vmatprep.subr.bf16.mxu0 0
        %979 = vmatpush1.bf16.msra.mxu0 %v974
        %980 = vmatprep.subr.bf16.mxu0 0
        %981 = vmatpush1.bf16.msra.mxu0 %v975
        %982 = vmatprep.subr.bf16.mxu0 0
        %983 = vmatpush1.bf16.msra.mxu0 %v976
        %984 = vmatprep.subr.bf16.mxu0 0
        %985 = vmatpush1.bf16.msra.mxu0 %v977
        %986 = vmatprep.subr.bf16.mxu0 0
        %987 = vmatpush1.bf16.msra.mxu0 0
        %988 = vmatprep.subr.bf16.mxu0 0
        %989 = vmatpush1.bf16.msra.mxu0 0
        %990 = vmatprep.subr.bf16.mxu0 0
        %991 = vmatpush1.bf16.msra.mxu0 0
        %992 = vmatprep.subr.bf16.mxu0 0
        %993 = vmatpush1.bf16.msra.mxu0 0
        %994 = vmatprep.subr.bf16.mxu0 0
        %995 = vmatpush1.bf16.msra.mxu0 0
        %996 = vmatprep.subr.bf16.mxu0 0
        %997 = vmatpush1.bf16.msra.mxu0 0
        %998 = vmatprep.subr.bf16.mxu0 0
        %999 = vmatpush1.bf16.msra.mxu0 0
        %1000 = vmatprep.subr.bf16.mxu0 0
        %1001 = vmatpush1.bf16.msra.mxu0 0
        %1002 = vmatprep.subr.bf16.mxu0 0
        %1003 = vmatpush1.bf16.msra.mxu0 0
        %1004 = vmatprep.subr.bf16.mxu0 0
        %1005 = vmatpush1.bf16.msra.mxu0 0
        %1006 = vmatprep.subr.bf16.mxu0 0
        %1007 = vmatpush1.bf16.msra.mxu0 0
        %1008 = vmatprep.subr.bf16.mxu0 0
        %1009 = vmatpush1.bf16.msra.mxu0 0
        %1010 = vmatprep.mubr.bf16.mxu0 0
        %1011 = vmatmul.mubr.bf16.gmra.mrb[0].mxu0 %v518
        %v1012 = vpop.f32.mrb[0].mxu0
        %v1013 = vadd.f32 0.0, %v1012
        %v1014 = vpop.f32.mrb[0].mxu0
        %v1015 = vpop.f32.mrb[0].mxu0
        %v1016 = vpop.f32.mrb[0].mxu0
        %1017 = vdwg.mxu0
        %v1018 = vpack.c.bf16 %v1013, %v1013
        %v1020 = vrot.slane %v789, 4
        %v1023 = vsel %vm434, %v560, %v1020
        %vm1025 = vcmp.gt.f32.partialorder %v324, 0.5
        %v1026 = vsel %vm1025, 1, 0
        %v1027 = vcvt.s32.f32 %v1026
        %vm1028 = vcmp.lt.f32.partialorder %v324, 6.5
        %v1029 = vsel %vm1028, 1, 0
        %v1030 = vcvt.s32.f32 %v1029
        %1033 = vrot.lane.b32.xlu0 %v1023, 9
        %v1034 = vpop.permute.xlu0 %1033
        %1035 = vrot.lane.b32.xlu0 %v1018, 9
        %v1036 = vpop.permute.xlu0 %1035
        %vm1037 = vcmask 72704
        %v1040 = vsel %vm1037, 0, %v1034
        %v1043 = vsel %vm1037, 0, %v1036
        %v1044 = vld [vmem:[%s4] sm:$0xf]
        %v1045 = vld [vmem:[%s4 + $0x4] sm:$0xf]
        %v1048 = vunpack.c.l.b16 %v1044
        %v1049 = vunpack.c.l.b16 %v1045
        %v1050 = vpack.c.b16 %v1049, %v1048
        %vm1051 = vcmask 195584
        %v1053 = vsel %vm1051, %v1050, 0
        %v1055 = vsel %vm434, %v1043, 0
        %1057 = vmatprep.subr.bf16.mxu0 0
        %1058 = vmatpush1.bf16.msra.mxu0 %v1040
        %1059 = vmatprep.subr.bf16.mxu0 0
        %1060 = vmatpush1.bf16.msra.mxu0 %v1055
        %1061 = vmatprep.subr.bf16.mxu0 0
        %1062 = vmatpush1.bf16.msra.mxu0 0
        %1063 = vmatprep.subr.bf16.mxu0 0
        %1064 = vmatpush1.bf16.msra.mxu0 0
        %1065 = vmatprep.subr.bf16.mxu0 0
        %1066 = vmatpush1.bf16.msra.mxu0 0
        %1067 = vmatprep.subr.bf16.mxu0 0
        %1068 = vmatpush1.bf16.msra.mxu0 0
        %1069 = vmatprep.subr.bf16.mxu0 0
        %1070 = vmatpush1.bf16.msra.mxu0 0
        %1071 = vmatprep.subr.bf16.mxu0 0
        %1072 = vmatpush1.bf16.msra.mxu0 0
        %1073 = vmatprep.subr.bf16.mxu0 0
        %1074 = vmatpush1.bf16.msra.mxu0 0
        %1075 = vmatprep.subr.bf16.mxu0 0
        %1076 = vmatpush1.bf16.msra.mxu0 0
        %1077 = vmatprep.subr.bf16.mxu0 0
        %1078 = vmatpush1.bf16.msra.mxu0 0
        %1079 = vmatprep.subr.bf16.mxu0 0
        %1080 = vmatpush1.bf16.msra.mxu0 0
        %1081 = vmatprep.subr.bf16.mxu0 0
        %1082 = vmatpush1.bf16.msra.mxu0 0
        %1083 = vmatprep.subr.bf16.mxu0 0
        %1084 = vmatpush1.bf16.msra.mxu0 0
        %1085 = vmatprep.subr.bf16.mxu0 0
        %1086 = vmatpush1.bf16.msra.mxu0 0
        %1087 = vmatprep.subr.bf16.mxu0 0
        %1088 = vmatpush1.bf16.msra.mxu0 0
        %1089 = vmatprep.mubr.bf16.mxu0 0
        %1090 = vmatmul.mubr.bf16.gmra.mrb[0].mxu0 %v1053
        %v1091 = vpop.f32.mrb[0].mxu0
        %v1092 = vadd.f32 0.0, %v1091
        %v1093 = vpop.f32.mrb[0].mxu0
        %v1094 = vpop.f32.mrb[0].mxu0
        %v1095 = vadd.f32 0.0, %v1094
        %v1096 = vpop.f32.mrb[0].mxu0
        %1097 = vdwg.mxu0
        %v1099 = vlaneseq
        %v1100 = vshrl.u32 %v1099, 7
        %v1101 = vsub.s32 0, %v1100
        %v1102 = vrot.slane %v1027, %v1101
        %v1104 = vmul.f32 %v1092, %v1102
        %v1105 = vmul.f32 %v1095, %v1102
        %v1106 = vadd.f32 %v1104, 0.0
        %v1107 = vadd.f32 %v1105, 0.0
        %1108 = vrot.lane.b32.xlu0 %v1023, 8
        %v1109 = vpop.permute.xlu0 %1108
        %1110 = vrot.lane.b32.xlu0 %v1018, 8
        %v1111 = vpop.permute.xlu0 %1110
        %v1113 = vsel %vm421, 0, %v1109
        %v1116 = vsel %vm421, 0, %v1111
        %s1117 = scalar_lea.vmem %s4, 8
        %v1118 = vld [vmem:[%s1117] sm:$0xf]
        %v1119 = vld [vmem:[%s1117 + $0x4] sm:$0xf]
        %v1122 = vunpack.c.l.b16 %v1118
        %v1123 = vunpack.c.l.b16 %v1119
        %v1124 = vpack.c.b16 %v1123, %v1122
        %v1126 = vsel %vm1051, %v1124, 0
        %v1128 = vsel %vm434, %v1116, 0
        %1130 = vmatprep.subr.bf16.mxu0 0
        %1131 = vmatpush1.bf16.msra.mxu0 %v1113
        %1132 = vmatprep.subr.bf16.mxu0 0
        %1133 = vmatpush1.bf16.msra.mxu0 %v1128
        %1134 = vmatprep.subr.bf16.mxu0 0
        %1135 = vmatpush1.bf16.msra.mxu0 0
        %1136 = vmatprep.subr.bf16.mxu0 0
        %1137 = vmatpush1.bf16.msra.mxu0 0
        %1138 = vmatprep.subr.bf16.mxu0 0
        %1139 = vmatpush1.bf16.msra.mxu0 0
        %1140 = vmatprep.subr.bf16.mxu0 0
        %1141 = vmatpush1.bf16.msra.mxu0 0
        %1142 = vmatprep.subr.bf16.mxu0 0
        %1143 = vmatpush1.bf16.msra.mxu0 0
        %1144 = vmatprep.subr.bf16.mxu0 0
        %1145 = vmatpush1.bf16.msra.mxu0 0
        %1146 = vmatprep.subr.bf16.mxu0 0
        %1147 = vmatpush1.bf16.msra.mxu0 0
        %1148 = vmatprep.subr.bf16.mxu0 0
        %1149 = vmatpush1.bf16.msra.mxu0 0
        %1150 = vmatprep.subr.bf16.mxu0 0
        %1151 = vmatpush1.bf16.msra.mxu0 0
        %1152 = vmatprep.subr.bf16.mxu0 0
        %1153 = vmatpush1.bf16.msra.mxu0 0
        %1154 = vmatprep.subr.bf16.mxu0 0
        %1155 = vmatpush1.bf16.msra.mxu0 0
        %1156 = vmatprep.subr.bf16.mxu0 0
        %1157 = vmatpush1.bf16.msra.mxu0 0
        %1158 = vmatprep.subr.bf16.mxu0 0
        %1159 = vmatpush1.bf16.msra.mxu0 0
        %1160 = vmatprep.subr.bf16.mxu0 0
        %1161 = vmatpush1.bf16.msra.mxu0 0
        %1162 = vmatprep.mubr.bf16.mxu0 0
        %1163 = vmatmul.mubr.bf16.gmra.mrb[0].mxu0 %v1126
        %v1164 = vpop.f32.mrb[0].mxu0
        %v1165 = vadd.f32 0.0, %v1164
        %v1166 = vpop.f32.mrb[0].mxu0
        %v1167 = vpop.f32.mrb[0].mxu0
        %v1168 = vadd.f32 0.0, %v1167
        %v1169 = vpop.f32.mrb[0].mxu0
        %1170 = vdwg.mxu0
        %v1171 = vadd.f32 %v1106, %v1165
        %v1172 = vadd.f32 %v1107, %v1168
        %1173 = vrot.lane.b32.xlu0 %v1023, 7
        %v1174 = vpop.permute.xlu0 %1173
        %1175 = vrot.lane.b32.xlu0 %v1018, 7
        %v1176 = vpop.permute.xlu0 %1175
        %vm1177 = vcmask 56320
        %v1179 = vsel %vm1177, 0, %v1174
        %v1182 = vsel %vm1177, 0, %v1176
        %s1183 = scalar_lea.vmem %s4, 16
        %v1184 = vld [vmem:[%s1183] sm:$0xf]
        %v1185 = vld [vmem:[%s1183 + $0x4] sm:$0xf]
        %v1188 = vunpack.c.l.b16 %v1184
        %v1189 = vunpack.c.l.b16 %v1185
        %v1190 = vpack.c.b16 %v1189, %v1188
        %v1192 = vsel %vm1051, %v1190, 0
        %v1194 = vsel %vm434, %v1182, 0
        %1196 = vmatprep.subr.bf16.mxu0 0
        %1197 = vmatpush1.bf16.msra.mxu0 %v1179
        %1198 = vmatprep.subr.bf16.mxu0 0
        %1199 = vmatpush1.bf16.msra.mxu0 %v1194
        %1200 = vmatprep.subr.bf16.mxu0 0
        %1201 = vmatpush1.bf16.msra.mxu0 0
        %1202 = vmatprep.subr.bf16.mxu0 0
        %1203 = vmatpush1.bf16.msra.mxu0 0
        %1204 = vmatprep.subr.bf16.mxu0 0
        %1205 = vmatpush1.bf16.msra.mxu0 0
        %1206 = vmatprep.subr.bf16.mxu0 0
        %1207 = vmatpush1.bf16.msra.mxu0 0
        %1208 = vmatprep.subr.bf16.mxu0 0
        %1209 = vmatpush1.bf16.msra.mxu0 0
        %1210 = vmatprep.subr.bf16.mxu0 0
        %1211 = vmatpush1.bf16.msra.mxu0 0
        %1212 = vmatprep.subr.bf16.mxu0 0
        %1213 = vmatpush1.bf16.msra.mxu0 0
        %1214 = vmatprep.subr.bf16.mxu0 0
        %1215 = vmatpush1.bf16.msra.mxu0 0
        %1216 = vmatprep.subr.bf16.mxu0 0
        %1217 = vmatpush1.bf16.msra.mxu0 0
        %1218 = vmatprep.subr.bf16.mxu0 0
        %1219 = vmatpush1.bf16.msra.mxu0 0
        %1220 = vmatprep.subr.bf16.mxu0 0
        %1221 = vmatpush1.bf16.msra.mxu0 0
        %1222 = vmatprep.subr.bf16.mxu0 0
        %1223 = vmatpush1.bf16.msra.mxu0 0
        %1224 = vmatprep.subr.bf16.mxu0 0
        %1225 = vmatpush1.bf16.msra.mxu0 0
        %1226 = vmatprep.subr.bf16.mxu0 0
        %1227 = vmatpush1.bf16.msra.mxu0 0
        %1228 = vmatprep.mubr.bf16.mxu0 0
        %1229 = vmatmul.mubr.bf16.gmra.mrb[0].mxu0 %v1192
        %v1230 = vpop.f32.mrb[0].mxu0
        %v1231 = vadd.f32 0.0, %v1230
        %v1232 = vpop.f32.mrb[0].mxu0
        %v1233 = vpop.f32.mrb[0].mxu0
        %v1234 = vadd.f32 0.0, %v1233
        %v1235 = vpop.f32.mrb[0].mxu0
        %1236 = vdwg.mxu0
        %v1238 = vlaneseq
        %v1239 = vshrl.u32 %v1238, 7
        %v1240 = vsub.s32 0, %v1239
        %v1241 = vrot.slane %v1030, %v1240
        %v1243 = vmul.f32 %v1231, %v1241
        %v1244 = vmul.f32 %v1234, %v1241
        %v1245 = vadd.f32 %v1171, %v1243
        %v1246 = vadd.f32 %v1172, %v1244
        %1247 = vrot.lane.b32.xlu0 %v1023, 1
        %v1248 = vpop.permute.xlu0 %1247
        %1249 = vrot.lane.b32.xlu0 %v1018, 1
        %v1250 = vpop.permute.xlu0 %1249
        %vm1251 = vcmask 7168
        %v1253 = vsel %vm1251, 0, %v1248
        %v1256 = vsel %vm1251, 0, %v1250
        %s1257 = scalar_lea.vmem %s4, 24
        %v1258 = vld [vmem:[%s1257] sm:$0xf]
        %v1259 = vld [vmem:[%s1257 + $0x4] sm:$0xf]
        %v1262 = vunpack.c.l.b16 %v1258
        %v1263 = vunpack.c.l.b16 %v1259
        %v1264 = vpack.c.b16 %v1263, %v1262
        %v1266 = vsel %vm1051, %v1264, 0
        %v1268 = vsel %vm434, %v1256, 0
        %1270 = vmatprep.subr.bf16.mxu0 0
        %1271 = vmatpush1.bf16.msra.mxu0 %v1253
        %1272 = vmatprep.subr.bf16.mxu0 0
        %1273 = vmatpush1.bf16.msra.mxu0 %v1268
        %1274 = vmatprep.subr.bf16.mxu0 0
        %1275 = vmatpush1.bf16.msra.mxu0 0
        %1276 = vmatprep.subr.bf16.mxu0 0
        %1277 = vmatpush1.bf16.msra.mxu0 0
        %1278 = vmatprep.subr.bf16.mxu0 0
        %1279 = vmatpush1.bf16.msra.mxu0 0
        %1280 = vmatprep.subr.bf16.mxu0 0
        %1281 = vmatpush1.bf16.msra.mxu0 0
        %1282 = vmatprep.subr.bf16.mxu0 0
        %1283 = vmatpush1.bf16.msra.mxu0 0
        %1284 = vmatprep.subr.bf16.mxu0 0
        %1285 = vmatpush1.bf16.msra.mxu0 0
        %1286 = vmatprep.subr.bf16.mxu0 0
        %1287 = vmatpush1.bf16.msra.mxu0 0
        %1288 = vmatprep.subr.bf16.mxu0 0
        %1289 = vmatpush1.bf16.msra.mxu0 0
        %1290 = vmatprep.subr.bf16.mxu0 0
        %1291 = vmatpush1.bf16.msra.mxu0 0
        %1292 = vmatprep.subr.bf16.mxu0 0
        %1293 = vmatpush1.bf16.msra.mxu0 0
        %1294 = vmatprep.subr.bf16.mxu0 0
        %1295 = vmatpush1.bf16.msra.mxu0 0
        %1296 = vmatprep.subr.bf16.mxu0 0
        %1297 = vmatpush1.bf16.msra.mxu0 0
        %1298 = vmatprep.subr.bf16.mxu0 0
        %1299 = vmatpush1.bf16.msra.mxu0 0
        %1300 = vmatprep.subr.bf16.mxu0 0
        %1301 = vmatpush1.bf16.msra.mxu0 0
        %1302 = vmatprep.mubr.bf16.mxu0 0
        %1303 = vmatmul.mubr.bf16.gmra.mrb[0].mxu0 %v1266
        %v1304 = vpop.f32.mrb[0].mxu0
        %v1305 = vadd.f32 0.0, %v1304
        %v1306 = vpop.f32.mrb[0].mxu0
        %v1307 = vpop.f32.mrb[0].mxu0
        %v1308 = vadd.f32 0.0, %v1307
        %v1309 = vpop.f32.mrb[0].mxu0
        %1310 = vdwg.mxu0
        %v1311 = vmul.f32 %v1305, %v1102
        %v1312 = vmul.f32 %v1308, %v1102
        %v1313 = vadd.f32 %v1245, %v1311
        %v1314 = vadd.f32 %v1246, %v1312
        %s1315 = scalar_lea.vmem %s4, 32
        %v1316 = vld [vmem:[%s1315] sm:$0xf]
        %v1317 = vld [vmem:[%s1315 + $0x4] sm:$0xf]
        %v1320 = vunpack.c.l.b16 %v1316
        %v1321 = vunpack.c.l.b16 %v1317
        %v1322 = vpack.c.b16 %v1321, %v1320
        %v1324 = vsel %vm1051, %v1322, 0
        %v1327 = vsel %vm434, %v1018, 0
        %1329 = vmatprep.subr.bf16.mxu0 0
        %1330 = vmatpush1.bf16.msra.mxu0 %v1023
        %1331 = vmatprep.subr.bf16.mxu0 0
        %1332 = vmatpush1.bf16.msra.mxu0 %v1327
        %1333 = vmatprep.subr.bf16.mxu0 0
        %1334 = vmatpush1.bf16.msra.mxu0 0
        %1335 = vmatprep.subr.bf16.mxu0 0
        %1336 = vmatpush1.bf16.msra.mxu0 0
        %1337 = vmatprep.subr.bf16.mxu0 0
        %1338 = vmatpush1.bf16.msra.mxu0 0
        %1339 = vmatprep.subr.bf16.mxu0 0
        %1340 = vmatpush1.bf16.msra.mxu0 0
        %1341 = vmatprep.subr.bf16.mxu0 0
        %1342 = vmatpush1.bf16.msra.mxu0 0
        %1343 = vmatprep.subr.bf16.mxu0 0
        %1344 = vmatpush1.bf16.msra.mxu0 0
        %1345 = vmatprep.subr.bf16.mxu0 0
        %1346 = vmatpush1.bf16.msra.mxu0 0
        %1347 = vmatprep.subr.bf16.mxu0 0
        %1348 = vmatpush1.bf16.msra.mxu0 0
        %1349 = vmatprep.subr.bf16.mxu0 0
        %1350 = vmatpush1.bf16.msra.mxu0 0
        %1351 = vmatprep.subr.bf16.mxu0 0
        %1352 = vmatpush1.bf16.msra.mxu0 0
        %1353 = vmatprep.subr.bf16.mxu0 0
        %1354 = vmatpush1.bf16.msra.mxu0 0
        %1355 = vmatprep.subr.bf16.mxu0 0
        %1356 = vmatpush1.bf16.msra.mxu0 0
        %1357 = vmatprep.subr.bf16.mxu0 0
        %1358 = vmatpush1.bf16.msra.mxu0 0
        %1359 = vmatprep.subr.bf16.mxu0 0
        %1360 = vmatpush1.bf16.msra.mxu0 0
        %1361 = vmatprep.mubr.bf16.mxu0 0
        %1362 = vmatmul.mubr.bf16.gmra.mrb[0].mxu0 %v1324
        %v1363 = vpop.f32.mrb[0].mxu0
        %v1364 = vadd.f32 0.0, %v1363
        %v1365 = vpop.f32.mrb[0].mxu0
        %v1366 = vpop.f32.mrb[0].mxu0
        %v1367 = vadd.f32 0.0, %v1366
        %v1368 = vpop.f32.mrb[0].mxu0
        %1369 = vdwg.mxu0
        %v1370 = vadd.f32 %v1313, %v1364
        %v1371 = vadd.f32 %v1314, %v1367
        %1372 = vrot.lane.b32.xlu0 %v1023, 127
        %v1373 = vpop.permute.xlu0 %1372
        %1374 = vrot.lane.b32.xlu0 %v1018, 127
        %v1375 = vpop.permute.xlu0 %1374
        %vm1376 = vcmask 515072
        %v1378 = vsel %vm1376, %v1373, 0
        %v1381 = vsel %vm1376, %v1375, 0
        %s1382 = scalar_lea.vmem %s4, 40
        %v1383 = vld [vmem:[%s1382] sm:$0xf]
        %v1384 = vld [vmem:[%s1382 + $0x4] sm:$0xf]
        %v1387 = vunpack.c.l.b16 %v1383
        %v1388 = vunpack.c.l.b16 %v1384
        %v1389 = vpack.c.b16 %v1388, %v1387
        %v1391 = vsel %vm1051, %v1389, 0
        %v1393 = vsel %vm434, %v1381, 0
        %1395 = vmatprep.subr.bf16.mxu0 0
        %1396 = vmatpush1.bf16.msra.mxu0 %v1378
        %1397 = vmatprep.subr.bf16.mxu0 0
        %1398 = vmatpush1.bf16.msra.mxu0 %v1393
        %1399 = vmatprep.subr.bf16.mxu0 0
        %1400 = vmatpush1.bf16.msra.mxu0 0
        %1401 = vmatprep.subr.bf16.mxu0 0
        %1402 = vmatpush1.bf16.msra.mxu0 0
        %1403 = vmatprep.subr.bf16.mxu0 0
        %1404 = vmatpush1.bf16.msra.mxu0 0
        %1405 = vmatprep.subr.bf16.mxu0 0
        %1406 = vmatpush1.bf16.msra.mxu0 0
        %1407 = vmatprep.subr.bf16.mxu0 0
        %1408 = vmatpush1.bf16.msra.mxu0 0
        %1409 = vmatprep.subr.bf16.mxu0 0
        %1410 = vmatpush1.bf16.msra.mxu0 0
        %1411 = vmatprep.subr.bf16.mxu0 0
        %1412 = vmatpush1.bf16.msra.mxu0 0
        %1413 = vmatprep.subr.bf16.mxu0 0
        %1414 = vmatpush1.bf16.msra.mxu0 0
        %1415 = vmatprep.subr.bf16.mxu0 0
        %1416 = vmatpush1.bf16.msra.mxu0 0
        %1417 = vmatprep.subr.bf16.mxu0 0
        %1418 = vmatpush1.bf16.msra.mxu0 0
        %1419 = vmatprep.subr.bf16.mxu0 0
        %1420 = vmatpush1.bf16.msra.mxu0 0
        %1421 = vmatprep.subr.bf16.mxu0 0
        %1422 = vmatpush1.bf16.msra.mxu0 0
        %1423 = vmatprep.subr.bf16.mxu0 0
        %1424 = vmatpush1.bf16.msra.mxu0 0
        %1425 = vmatprep.subr.bf16.mxu0 0
        %1426 = vmatpush1.bf16.msra.mxu0 0
        %1427 = vmatprep.mubr.bf16.mxu0 0
        %1428 = vmatmul.mubr.bf16.gmra.mrb[0].mxu0 %v1391
        %v1429 = vpop.f32.mrb[0].mxu0
        %v1430 = vadd.f32 0.0, %v1429
        %v1431 = vpop.f32.mrb[0].mxu0
        %v1432 = vpop.f32.mrb[0].mxu0
        %v1433 = vadd.f32 0.0, %v1432
        %v1434 = vpop.f32.mrb[0].mxu0
        %1435 = vdwg.mxu0
        %v1436 = vmul.f32 %v1430, %v1241
        %v1437 = vmul.f32 %v1433, %v1241
        %v1438 = vadd.f32 %v1370, %v1436
        %v1439 = vadd.f32 %v1371, %v1437
        %1440 = vrot.lane.b32.xlu0 %v1023, 121
        %v1441 = vpop.permute.xlu0 %1440
        %1442 = vrot.lane.b32.xlu0 %v1018, 121
        %v1443 = vpop.permute.xlu0 %1442
        %vm1444 = vcmask 465920
        %v1446 = vsel %vm1444, %v1441, 0
        %v1449 = vsel %vm1444, %v1443, 0
        %s1450 = scalar_lea.vmem %s4, 48
        %v1451 = vld [vmem:[%s1450] sm:$0xf]
        %v1452 = vld [vmem:[%s1450 + $0x4] sm:$0xf]
        %v1455 = vunpack.c.l.b16 %v1451
        %v1456 = vunpack.c.l.b16 %v1452
        %v1457 = vpack.c.b16 %v1456, %v1455
        %v1459 = vsel %vm1051, %v1457, 0
        %v1461 = vsel %vm434, %v1449, 0
        %1463 = vmatprep.subr.bf16.mxu0 0
        %1464 = vmatpush1.bf16.msra.mxu0 %v1446
        %1465 = vmatprep.subr.bf16.mxu0 0
        %1466 = vmatpush1.bf16.msra.mxu0 %v1461
        %1467 = vmatprep.subr.bf16.mxu0 0
        %1468 = vmatpush1.bf16.msra.mxu0 0
        %1469 = vmatprep.subr.bf16.mxu0 0
        %1470 = vmatpush1.bf16.msra.mxu0 0
        %1471 = vmatprep.subr.bf16.mxu0 0
        %1472 = vmatpush1.bf16.msra.mxu0 0
        %1473 = vmatprep.subr.bf16.mxu0 0
        %1474 = vmatpush1.bf16.msra.mxu0 0
        %1475 = vmatprep.subr.bf16.mxu0 0
        %1476 = vmatpush1.bf16.msra.mxu0 0
        %1477 = vmatprep.subr.bf16.mxu0 0
        %1478 = vmatpush1.bf16.msra.mxu0 0
        %1479 = vmatprep.subr.bf16.mxu0 0
        %1480 = vmatpush1.bf16.msra.mxu0 0
        %1481 = vmatprep.subr.bf16.mxu0 0
        %1482 = vmatpush1.bf16.msra.mxu0 0
        %1483 = vmatprep.subr.bf16.mxu0 0
        %1484 = vmatpush1.bf16.msra.mxu0 0
        %1485 = vmatprep.subr.bf16.mxu0 0
        %1486 = vmatpush1.bf16.msra.mxu0 0
        %1487 = vmatprep.subr.bf16.mxu0 0
        %1488 = vmatpush1.bf16.msra.mxu0 0
        %1489 = vmatprep.subr.bf16.mxu0 0
        %1490 = vmatpush1.bf16.msra.mxu0 0
        %1491 = vmatprep.subr.bf16.mxu0 0
        %1492 = vmatpush1.bf16.msra.mxu0 0
        %1493 = vmatprep.subr.bf16.mxu0 0
        %1494 = vmatpush1.bf16.msra.mxu0 0
        %1495 = vmatprep.mubr.bf16.mxu0 0
        %1496 = vmatmul.mubr.bf16.gmra.mrb[0].mxu0 %v1459
        %v1497 = vpop.f32.mrb[0].mxu0
        %v1498 = vadd.f32 0.0, %v1497
        %v1499 = vpop.f32.mrb[0].mxu0
        %v1500 = vpop.f32.mrb[0].mxu0
        %v1501 = vadd.f32 0.0, %v1500
        %v1502 = vpop.f32.mrb[0].mxu0
        %1503 = vdwg.mxu0
        %v1504 = vmul.f32 %v1498, %v1102
        %v1505 = vmul.f32 %v1501, %v1102
        %v1506 = vadd.f32 %v1438, %v1504
        %v1507 = vadd.f32 %v1439, %v1505
        %1508 = vrot.lane.b32.xlu0 %v1023, 120
        %v1509 = vpop.permute.xlu0 %1508
        %1510 = vrot.lane.b32.xlu0 %v1018, 120
        %v1511 = vpop.permute.xlu0 %1510
        %vm1512 = vcmask 457728
        %v1514 = vsel %vm1512, %v1509, 0
        %v1517 = vsel %vm1512, %v1511, 0
        %s1518 = scalar_lea.vmem %s4, 56
        %v1519 = vld [vmem:[%s1518] sm:$0xf]
        %v1520 = vld [vmem:[%s1518 + $0x4] sm:$0xf]
        %v1523 = vunpack.c.l.b16 %v1519
        %v1524 = vunpack.c.l.b16 %v1520
        %v1525 = vpack.c.b16 %v1524, %v1523
        %v1527 = vsel %vm1051, %v1525, 0
        %v1529 = vsel %vm434, %v1517, 0
        %1531 = vmatprep.subr.bf16.mxu0 0
        %1532 = vmatpush1.bf16.msra.mxu0 %v1514
        %1533 = vmatprep.subr.bf16.mxu0 0
        %1534 = vmatpush1.bf16.msra.mxu0 %v1529
        %1535 = vmatprep.subr.bf16.mxu0 0
        %1536 = vmatpush1.bf16.msra.mxu0 0
        %1537 = vmatprep.subr.bf16.mxu0 0
        %1538 = vmatpush1.bf16.msra.mxu0 0
        %1539 = vmatprep.subr.bf16.mxu0 0
        %1540 = vmatpush1.bf16.msra.mxu0 0
        %1541 = vmatprep.subr.bf16.mxu0 0
        %1542 = vmatpush1.bf16.msra.mxu0 0
        %1543 = vmatprep.subr.bf16.mxu0 0
        %1544 = vmatpush1.bf16.msra.mxu0 0
        %1545 = vmatprep.subr.bf16.mxu0 0
        %1546 = vmatpush1.bf16.msra.mxu0 0
        %1547 = vmatprep.subr.bf16.mxu0 0
        %1548 = vmatpush1.bf16.msra.mxu0 0
        %1549 = vmatprep.subr.bf16.mxu0 0
        %1550 = vmatpush1.bf16.msra.mxu0 0
        %1551 = vmatprep.subr.bf16.mxu0 0
        %1552 = vmatpush1.bf16.msra.mxu0 0
        %1553 = vmatprep.subr.bf16.mxu0 0
        %1554 = vmatpush1.bf16.msra.mxu0 0
        %1555 = vmatprep.subr.bf16.mxu0 0
        %1556 = vmatpush1.bf16.msra.mxu0 0
        %1557 = vmatprep.subr.bf16.mxu0 0
        %1558 = vmatpush1.bf16.msra.mxu0 0
        %1559 = vmatprep.subr.bf16.mxu0 0
        %1560 = vmatpush1.bf16.msra.mxu0 0
        %1561 = vmatprep.subr.bf16.mxu0 0
        %1562 = vmatpush1.bf16.msra.mxu0 0
        %1563 = vmatprep.mubr.bf16.mxu0 0
        %1564 = vmatmul.mubr.bf16.gmra.mrb[0].mxu0 %v1527
        %v1565 = vpop.f32.mrb[0].mxu0
        %v1566 = vadd.f32 0.0, %v1565
        %v1567 = vpop.f32.mrb[0].mxu0
        %v1568 = vpop.f32.mrb[0].mxu0
        %v1569 = vadd.f32 0.0, %v1568
        %v1570 = vpop.f32.mrb[0].mxu0
        %1571 = vdwg.mxu0
        %v1572 = vadd.f32 %v1506, %v1566
        %v1573 = vadd.f32 %v1507, %v1569
        %1574 = vrot.lane.b32.xlu0 %v1023, 119
        %v1575 = vpop.permute.xlu0 %1574
        %1576 = vrot.lane.b32.xlu0 %v1018, 119
        %v1577 = vpop.permute.xlu0 %1576
        %vm1578 = vcmask 449536
        %v1580 = vsel %vm1578, %v1575, 0
        %v1583 = vsel %vm1578, %v1577, 0
        %s1584 = scalar_lea.vmem %s4, 64
        %v1585 = vld [vmem:[%s1584] sm:$0xf]
        %v1586 = vld [vmem:[%s1584 + $0x4] sm:$0xf]
        %v1589 = vunpack.c.l.b16 %v1585
        %v1590 = vunpack.c.l.b16 %v1586
        %v1591 = vpack.c.b16 %v1590, %v1589
        %v1593 = vsel %vm1051, %v1591, 0
        %v1595 = vsel %vm434, %v1583, 0
        %1597 = vmatprep.subr.bf16.mxu0 0
        %1598 = vmatpush1.bf16.msra.mxu0 %v1580
        %1599 = vmatprep.subr.bf16.mxu0 0
        %1600 = vmatpush1.bf16.msra.mxu0 %v1595
        %1601 = vmatprep.subr.bf16.mxu0 0
        %1602 = vmatpush1.bf16.msra.mxu0 0
        %1603 = vmatprep.subr.bf16.mxu0 0
        %1604 = vmatpush1.bf16.msra.mxu0 0
        %1605 = vmatprep.subr.bf16.mxu0 0
        %1606 = vmatpush1.bf16.msra.mxu0 0
        %1607 = vmatprep.subr.bf16.mxu0 0
        %1608 = vmatpush1.bf16.msra.mxu0 0
        %1609 = vmatprep.subr.bf16.mxu0 0
        %1610 = vmatpush1.bf16.msra.mxu0 0
        %1611 = vmatprep.subr.bf16.mxu0 0
        %1612 = vmatpush1.bf16.msra.mxu0 0
        %1613 = vmatprep.subr.bf16.mxu0 0
        %1614 = vmatpush1.bf16.msra.mxu0 0
        %1615 = vmatprep.subr.bf16.mxu0 0
        %1616 = vmatpush1.bf16.msra.mxu0 0
        %1617 = vmatprep.subr.bf16.mxu0 0
        %1618 = vmatpush1.bf16.msra.mxu0 0
        %1619 = vmatprep.subr.bf16.mxu0 0
        %1620 = vmatpush1.bf16.msra.mxu0 0
        %1621 = vmatprep.subr.bf16.mxu0 0
        %1622 = vmatpush1.bf16.msra.mxu0 0
        %1623 = vmatprep.subr.bf16.mxu0 0
        %1624 = vmatpush1.bf16.msra.mxu0 0
        %1625 = vmatprep.subr.bf16.mxu0 0
        %1626 = vmatpush1.bf16.msra.mxu0 0
        %1627 = vmatprep.subr.bf16.mxu0 0
        %1628 = vmatpush1.bf16.msra.mxu0 0
        %1629 = vmatprep.mubr.bf16.mxu0 0
        %1630 = vmatmul.mubr.bf16.gmra.mrb[0].mxu0 %v1593
        %v1631 = vpop.f32.mrb[0].mxu0
        %v1632 = vadd.f32 0.0, %v1631
        %v1633 = vpop.f32.mrb[0].mxu0
        %v1634 = vpop.f32.mrb[0].mxu0
        %v1635 = vadd.f32 0.0, %v1634
        %v1636 = vpop.f32.mrb[0].mxu0
        %1637 = vdwg.mxu0
        %v1638 = vmul.f32 %v1632, %v1241
        %v1639 = vmul.f32 %v1635, %v1241
        %v1640 = vadd.f32 %v1572, %v1638
        %v1641 = vadd.f32 %v1573, %v1639
        %v1642 = vld [vmem:[%s5] sm:$0xff]
        %v1643 = vld [vmem:[%s5 + $0x8] sm:$0xff]
        %1645 = vset.pattern.permute.xlu0 0
        %1646 = vperm.xlu0 %1645, %v1642
        %v1647 = vpop.permute.xlu0 %1646
        %1650 = vset.pattern.permute.xlu0 0
        %1651 = vperm.xlu0 %1650, %v1643
        %v1652 = vpop.permute.xlu0 %1651
        %v1654 = vadd.f32 %v1640, %v1647
        %v1655 = vadd.f32 %v1641, %v1652
        %vm1656 = vcmp.gt.f32.partialorder %v1654, 0.0
        %vm1657 = vcmp.gt.f32.partialorder %v1655, 0.0
        %v1658 = vmul.f32 %v1654, 0.1
        %v1659 = vmul.f32 %v1655, 0.1
        %v1660 = vsel %vm1656, %v1654, %v1658
        %v1661 = vsel %vm1657, %v1655, %v1659
        %v1662 = vpack.c.bf16 %v1661, %v1660
        %1664 = vrot.lane.b32.xlu0 %v1662, 9
        %v1665 = vpop.permute.xlu0 %1664
        %v1667 = vsel %vm1037, 0, %v1665
        %v1669 = vld [vmem:[%s6] sm:$0xf]
        %vm1670 = vcmask 130048
        %v1672 = vsel %vm1670, %v1669, 0
        %1674 = vmatprep.subr.bf16.mxu0 0
        %1675 = vmatpush1.bf16.msra.mxu0 %v1667
        %1676 = vmatprep.subr.bf16.mxu0 0
        %1677 = vmatpush1.bf16.msra.mxu0 0
        %1678 = vmatprep.subr.bf16.mxu0 0
        %1679 = vmatpush1.bf16.msra.mxu0 0
        %1680 = vmatprep.subr.bf16.mxu0 0
        %1681 = vmatpush1.bf16.msra.mxu0 0
        %1682 = vmatprep.subr.bf16.mxu0 0
        %1683 = vmatpush1.bf16.msra.mxu0 0
        %1684 = vmatprep.subr.bf16.mxu0 0
        %1685 = vmatpush1.bf16.msra.mxu0 0
        %1686 = vmatprep.subr.bf16.mxu0 0
        %1687 = vmatpush1.bf16.msra.mxu0 0
        %1688 = vmatprep.subr.bf16.mxu0 0
        %1689 = vmatpush1.bf16.msra.mxu0 0
        %1690 = vmatprep.subr.bf16.mxu0 0
        %1691 = vmatpush1.bf16.msra.mxu0 0
        %1692 = vmatprep.subr.bf16.mxu0 0
        %1693 = vmatpush1.bf16.msra.mxu0 0
        %1694 = vmatprep.subr.bf16.mxu0 0
        %1695 = vmatpush1.bf16.msra.mxu0 0
        %1696 = vmatprep.subr.bf16.mxu0 0
        %1697 = vmatpush1.bf16.msra.mxu0 0
        %1698 = vmatprep.subr.bf16.mxu0 0
        %1699 = vmatpush1.bf16.msra.mxu0 0
        %1700 = vmatprep.subr.bf16.mxu0 0
        %1701 = vmatpush1.bf16.msra.mxu0 0
        %1702 = vmatprep.subr.bf16.mxu0 0
        %1703 = vmatpush1.bf16.msra.mxu0 0
        %1704 = vmatprep.subr.bf16.mxu0 0
        %1705 = vmatpush1.bf16.msra.mxu0 0
        %1706 = vmatprep.mubr.bf16.mxu0 0
        %1707 = vmatmul.mubr.bf16.gmra.mrb[0].mxu0 %v1672
        %v1708 = vpop.f32.mrb[0].mxu0
        %v1709 = vadd.f32 0.0, %v1708
        %v1710 = vpop.f32.mrb[0].mxu0
        %v1711 = vpop.f32.mrb[0].mxu0
        %v1712 = vpop.f32.mrb[0].mxu0
        %1713 = vdwg.mxu0
        %v1714 = vmul.f32 %v1709, %v1102
        %v1715 = vadd.f32 %v1714, 0.0
        %1716 = vrot.lane.b32.xlu0 %v1662, 8
        %v1717 = vpop.permute.xlu0 %1716
        %v1719 = vsel %vm421, 0, %v1717
        %s1721 = scalar_lea.vmem %s6, 4
        %v1722 = vld [vmem:[%s1721] sm:$0xf]
        %v1724 = vsel %vm1670, %v1722, 0
        %1726 = vmatprep.subr.bf16.mxu0 0
        %1727 = vmatpush1.bf16.msra.mxu0 %v1719
        %1728 = vmatprep.subr.bf16.mxu0 0
        %1729 = vmatpush1.bf16.msra.mxu0 0
        %1730 = vmatprep.subr.bf16.mxu0 0
        %1731 = vmatpush1.bf16.msra.mxu0 0
        %1732 = vmatprep.subr.bf16.mxu0 0
        %1733 = vmatpush1.bf16.msra.mxu0 0
        %1734 = vmatprep.subr.bf16.mxu0 0
        %1735 = vmatpush1.bf16.msra.mxu0 0
        %1736 = vmatprep.subr.bf16.mxu0 0
        %1737 = vmatpush1.bf16.msra.mxu0 0
        %1738 = vmatprep.subr.bf16.mxu0 0
        %1739 = vmatpush1.bf16.msra.mxu0 0
        %1740 = vmatprep.subr.bf16.mxu0 0
        %1741 = vmatpush1.bf16.msra.mxu0 0
        %1742 = vmatprep.subr.bf16.mxu0 0
        %1743 = vmatpush1.bf16.msra.mxu0 0
        %1744 = vmatprep.subr.bf16.mxu0 0
        %1745 = vmatpush1.bf16.msra.mxu0 0
        %1746 = vmatprep.subr.bf16.mxu0 0
        %1747 = vmatpush1.bf16.msra.mxu0 0
        %1748 = vmatprep.subr.bf16.mxu0 0
        %1749 = vmatpush1.bf16.msra.mxu0 0
        %1750 = vmatprep.subr.bf16.mxu0 0
        %1751 = vmatpush1.bf16.msra.mxu0 0
        %1752 = vmatprep.subr.bf16.mxu0 0
        %1753 = vmatpush1.bf16.msra.mxu0 0
        %1754 = vmatprep.subr.bf16.mxu0 0
        %1755 = vmatpush1.bf16.msra.mxu0 0
        %1756 = vmatprep.subr.bf16.mxu0 0
        %1757 = vmatpush1.bf16.msra.mxu0 0
        %1758 = vmatprep.mubr.bf16.mxu0 0
        %1759 = vmatmul.mubr.bf16.gmra.mrb[0].mxu0 %v1724
        %v1760 = vpop.f32.mrb[0].mxu0
        %v1761 = vadd.f32 0.0, %v1760
        %v1762 = vpop.f32.mrb[0].mxu0
        %v1763 = vpop.f32.mrb[0].mxu0
        %v1764 = vpop.f32.mrb[0].mxu0
        %1765 = vdwg.mxu0
        %v1766 = vadd.f32 %v1715, %v1761
        %1767 = vrot.lane.b32.xlu0 %v1662, 7
        %v1768 = vpop.permute.xlu0 %1767
        %v1770 = vsel %vm1177, 0, %v1768
        %s1772 = scalar_lea.vmem %s6, 8
        %v1773 = vld [vmem:[%s1772] sm:$0xf]
        %v1775 = vsel %vm1670, %v1773, 0
        %1777 = vmatprep.subr.bf16.mxu0 0
        %1778 = vmatpush1.bf16.msra.mxu0 %v1770
        %1779 = vmatprep.subr.bf16.mxu0 0
        %1780 = vmatpush1.bf16.msra.mxu0 0
        %1781 = vmatprep.subr.bf16.mxu0 0
        %1782 = vmatpush1.bf16.msra.mxu0 0
        %1783 = vmatprep.subr.bf16.mxu0 0
        %1784 = vmatpush1.bf16.msra.mxu0 0
        %1785 = vmatprep.subr.bf16.mxu0 0
        %1786 = vmatpush1.bf16.msra.mxu0 0
        %1787 = vmatprep.subr.bf16.mxu0 0
        %1788 = vmatpush1.bf16.msra.mxu0 0
        %1789 = vmatprep.subr.bf16.mxu0 0
        %1790 = vmatpush1.bf16.msra.mxu0 0
        %1791 = vmatprep.subr.bf16.mxu0 0
        %1792 = vmatpush1.bf16.msra.mxu0 0
        %1793 = vmatprep.subr.bf16.mxu0 0
        %1794 = vmatpush1.bf16.msra.mxu0 0
        %1795 = vmatprep.subr.bf16.mxu0 0
        %1796 = vmatpush1.bf16.msra.mxu0 0
        %1797 = vmatprep.subr.bf16.mxu0 0
        %1798 = vmatpush1.bf16.msra.mxu0 0
        %1799 = vmatprep.subr.bf16.mxu0 0
        %1800 = vmatpush1.bf16.msra.mxu0 0
        %1801 = vmatprep.subr.bf16.mxu0 0
        %1802 = vmatpush1.bf16.msra.mxu0 0
        %1803 = vmatprep.subr.bf16.mxu0 0
        %1804 = vmatpush1.bf16.msra.mxu0 0
        %1805 = vmatprep.subr.bf16.mxu0 0
        %1806 = vmatpush1.bf16.msra.mxu0 0
        %1807 = vmatprep.subr.bf16.mxu0 0
        %1808 = vmatpush1.bf16.msra.mxu0 0
        %1809 = vmatprep.mubr.bf16.mxu0 0
        %1810 = vmatmul.mubr.bf16.gmra.mrb[0].mxu0 %v1775
        %v1811 = vpop.f32.mrb[0].mxu0
        %v1812 = vadd.f32 0.0, %v1811
        %v1813 = vpop.f32.mrb[0].mxu0
        %v1814 = vpop.f32.mrb[0].mxu0
        %v1815 = vpop.f32.mrb[0].mxu0
        %1816 = vdwg.mxu0
        %v1817 = vmul.f32 %v1812, %v1241
        %v1818 = vadd.f32 %v1766, %v1817
        %1819 = vrot.lane.b32.xlu0 %v1662, 1
        %v1820 = vpop.permute.xlu0 %1819
        %v1822 = vsel %vm1251, 0, %v1820
        %s1824 = scalar_lea.vmem %s6, 12
        %v1825 = vld [vmem:[%s1824] sm:$0xf]
        %v1827 = vsel %vm1670, %v1825, 0
        %1829 = vmatprep.subr.bf16.mxu0 0
        %1830 = vmatpush1.bf16.msra.mxu0 %v1822
        %1831 = vmatprep.subr.bf16.mxu0 0
        %1832 = vmatpush1.bf16.msra.mxu0 0
        %1833 = vmatprep.subr.bf16.mxu0 0
        %1834 = vmatpush1.bf16.msra.mxu0 0
        %1835 = vmatprep.subr.bf16.mxu0 0
        %1836 = vmatpush1.bf16.msra.mxu0 0
        %1837 = vmatprep.subr.bf16.mxu0 0
        %1838 = vmatpush1.bf16.msra.mxu0 0
        %1839 = vmatprep.subr.bf16.mxu0 0
        %1840 = vmatpush1.bf16.msra.mxu0 0
        %1841 = vmatprep.subr.bf16.mxu0 0
        %1842 = vmatpush1.bf16.msra.mxu0 0
        %1843 = vmatprep.subr.bf16.mxu0 0
        %1844 = vmatpush1.bf16.msra.mxu0 0
        %1845 = vmatprep.subr.bf16.mxu0 0
        %1846 = vmatpush1.bf16.msra.mxu0 0
        %1847 = vmatprep.subr.bf16.mxu0 0
        %1848 = vmatpush1.bf16.msra.mxu0 0
        %1849 = vmatprep.subr.bf16.mxu0 0
        %1850 = vmatpush1.bf16.msra.mxu0 0
        %1851 = vmatprep.subr.bf16.mxu0 0
        %1852 = vmatpush1.bf16.msra.mxu0 0
        %1853 = vmatprep.subr.bf16.mxu0 0
        %1854 = vmatpush1.bf16.msra.mxu0 0
        %1855 = vmatprep.subr.bf16.mxu0 0
        %1856 = vmatpush1.bf16.msra.mxu0 0
        %1857 = vmatprep.subr.bf16.mxu0 0
        %1858 = vmatpush1.bf16.msra.mxu0 0
        %1859 = vmatprep.subr.bf16.mxu0 0
        %1860 = vmatpush1.bf16.msra.mxu0 0
        %1861 = vmatprep.mubr.bf16.mxu0 0
        %1862 = vmatmul.mubr.bf16.gmra.mrb[0].mxu0 %v1827
        %v1863 = vpop.f32.mrb[0].mxu0
        %v1864 = vadd.f32 0.0, %v1863
        %v1865 = vpop.f32.mrb[0].mxu0
        %v1866 = vpop.f32.mrb[0].mxu0
        %v1867 = vpop.f32.mrb[0].mxu0
        %1868 = vdwg.mxu0
        %v1869 = vmul.f32 %v1864, %v1102
        %v1870 = vadd.f32 %v1818, %v1869
        %s1871 = scalar_lea.vmem %s6, 16
        %v1872 = vld [vmem:[%s1871] sm:$0xf]
        %v1874 = vsel %vm1670, %v1872, 0
        %1876 = vmatprep.subr.bf16.mxu0 0
        %1877 = vmatpush1.bf16.msra.mxu0 %v1662
        %1878 = vmatprep.subr.bf16.mxu0 0
        %1879 = vmatpush1.bf16.msra.mxu0 0
        %1880 = vmatprep.subr.bf16.mxu0 0
        %1881 = vmatpush1.bf16.msra.mxu0 0
        %1882 = vmatprep.subr.bf16.mxu0 0
        %1883 = vmatpush1.bf16.msra.mxu0 0
        %1884 = vmatprep.subr.bf16.mxu0 0
        %1885 = vmatpush1.bf16.msra.mxu0 0
        %1886 = vmatprep.subr.bf16.mxu0 0
        %1887 = vmatpush1.bf16.msra.mxu0 0
        %1888 = vmatprep.subr.bf16.mxu0 0
        %1889 = vmatpush1.bf16.msra.mxu0 0
        %1890 = vmatprep.subr.bf16.mxu0 0
        %1891 = vmatpush1.bf16.msra.mxu0 0
        %1892 = vmatprep.subr.bf16.mxu0 0
        %1893 = vmatpush1.bf16.msra.mxu0 0
        %1894 = vmatprep.subr.bf16.mxu0 0
        %1895 = vmatpush1.bf16.msra.mxu0 0
        %1896 = vmatprep.subr.bf16.mxu0 0
        %1897 = vmatpush1.bf16.msra.mxu0 0
        %1898 = vmatprep.subr.bf16.mxu0 0
        %1899 = vmatpush1.bf16.msra.mxu0 0
        %1900 = vmatprep.subr.bf16.mxu0 0
        %1901 = vmatpush1.bf16.msra.mxu0 0
        %1902 = vmatprep.subr.bf16.mxu0 0
        %1903 = vmatpush1.bf16.msra.mxu0 0
        %1904 = vmatprep.subr.bf16.mxu0 0
        %1905 = vmatpush1.bf16.msra.mxu0 0
        %1906 = vmatprep.subr.bf16.mxu0 0
        %1907 = vmatpush1.bf16.msra.mxu0 0
        %1908 = vmatprep.mubr.bf16.mxu0 0
        %1909 = vmatmul.mubr.bf16.gmra.mrb[0].mxu0 %v1874
        %v1910 = vpop.f32.mrb[0].mxu0
        %v1911 = vadd.f32 0.0, %v1910
        %v1912 = vpop.f32.mrb[0].mxu0
        %v1913 = vpop.f32.mrb[0].mxu0
        %v1914 = vpop.f32.mrb[0].mxu0
        %1915 = vdwg.mxu0
        %v1916 = vadd.f32 %v1870, %v1911
        %1917 = vrot.lane.b32.xlu0 %v1662, 127
        %v1918 = vpop.permute.xlu0 %1917
        %v1920 = vsel %vm1376, %v1918, 0
        %s1922 = scalar_lea.vmem %s6, 20
        %v1923 = vld [vmem:[%s1922] sm:$0xf]
        %v1925 = vsel %vm1670, %v1923, 0
        %1927 = vmatprep.subr.bf16.mxu0 0
        %1928 = vmatpush1.bf16.msra.mxu0 %v1920
        %1929 = vmatprep.subr.bf16.mxu0 0
        %1930 = vmatpush1.bf16.msra.mxu0 0
        %1931 = vmatprep.subr.bf16.mxu0 0
        %1932 = vmatpush1.bf16.msra.mxu0 0
        %1933 = vmatprep.subr.bf16.mxu0 0
        %1934 = vmatpush1.bf16.msra.mxu0 0
        %1935 = vmatprep.subr.bf16.mxu0 0
        %1936 = vmatpush1.bf16.msra.mxu0 0
        %1937 = vmatprep.subr.bf16.mxu0 0
        %1938 = vmatpush1.bf16.msra.mxu0 0
        %1939 = vmatprep.subr.bf16.mxu0 0
        %1940 = vmatpush1.bf16.msra.mxu0 0
        %1941 = vmatprep.subr.bf16.mxu0 0
        %1942 = vmatpush1.bf16.msra.mxu0 0
        %1943 = vmatprep.subr.bf16.mxu0 0
        %1944 = vmatpush1.bf16.msra.mxu0 0
        %1945 = vmatprep.subr.bf16.mxu0 0
        %1946 = vmatpush1.bf16.msra.mxu0 0
        %1947 = vmatprep.subr.bf16.mxu0 0
        %1948 = vmatpush1.bf16.msra.mxu0 0
        %1949 = vmatprep.subr.bf16.mxu0 0
        %1950 = vmatpush1.bf16.msra.mxu0 0
        %1951 = vmatprep.subr.bf16.mxu0 0
        %1952 = vmatpush1.bf16.msra.mxu0 0
        %1953 = vmatprep.subr.bf16.mxu0 0
        %1954 = vmatpush1.bf16.msra.mxu0 0
        %1955 = vmatprep.subr.bf16.mxu0 0
        %1956 = vmatpush1.bf16.msra.mxu0 0
        %1957 = vmatprep.subr.bf16.mxu0 0
        %1958 = vmatpush1.bf16.msra.mxu0 0
        %1959 = vmatprep.mubr.bf16.mxu0 0
        %1960 = vmatmul.mubr.bf16.gmra.mrb[0].mxu0 %v1925
        %v1961 = vpop.f32.mrb[0].mxu0
        %v1962 = vadd.f32 0.0, %v1961
        %v1963 = vpop.f32.mrb[0].mxu0
        %v1964 = vpop.f32.mrb[0].mxu0
        %v1965 = vpop.f32.mrb[0].mxu0
        %1966 = vdwg.mxu0
        %v1967 = vmul.f32 %v1962, %v1241
        %v1968 = vadd.f32 %v1916, %v1967
        %1969 = vrot.lane.b32.xlu0 %v1662, 121
        %v1970 = vpop.permute.xlu0 %1969
        %v1972 = vsel %vm1444, %v1970, 0
        %s1974 = scalar_lea.vmem %s6, 24
        %v1975 = vld [vmem:[%s1974] sm:$0xf]
        %v1977 = vsel %vm1670, %v1975, 0
        %1979 = vmatprep.subr.bf16.mxu0 0
        %1980 = vmatpush1.bf16.msra.mxu0 %v1972
        %1981 = vmatprep.subr.bf16.mxu0 0
        %1982 = vmatpush1.bf16.msra.mxu0 0
        %1983 = vmatprep.subr.bf16.mxu0 0
        %1984 = vmatpush1.bf16.msra.mxu0 0
        %1985 = vmatprep.subr.bf16.mxu0 0
        %1986 = vmatpush1.bf16.msra.mxu0 0
        %1987 = vmatprep.subr.bf16.mxu0 0
        %1988 = vmatpush1.bf16.msra.mxu0 0
        %1989 = vmatprep.subr.bf16.mxu0 0
        %1990 = vmatpush1.bf16.msra.mxu0 0
        %1991 = vmatprep.subr.bf16.mxu0 0
        %1992 = vmatpush1.bf16.msra.mxu0 0
        %1993 = vmatprep.subr.bf16.mxu0 0
        %1994 = vmatpush1.bf16.msra.mxu0 0
        %1995 = vmatprep.subr.bf16.mxu0 0
        %1996 = vmatpush1.bf16.msra.mxu0 0
        %1997 = vmatprep.subr.bf16.mxu0 0
        %1998 = vmatpush1.bf16.msra.mxu0 0
        %1999 = vmatprep.subr.bf16.mxu0 0
        %2000 = vmatpush1.bf16.msra.mxu0 0
        %2001 = vmatprep.subr.bf16.mxu0 0
        %2002 = vmatpush1.bf16.msra.mxu0 0
        %2003 = vmatprep.subr.bf16.mxu0 0
        %2004 = vmatpush1.bf16.msra.mxu0 0
        %2005 = vmatprep.subr.bf16.mxu0 0
        %2006 = vmatpush1.bf16.msra.mxu0 0
        %2007 = vmatprep.subr.bf16.mxu0 0
        %2008 = vmatpush1.bf16.msra.mxu0 0
        %2009 = vmatprep.subr.bf16.mxu0 0
        %2010 = vmatpush1.bf16.msra.mxu0 0
        %2011 = vmatprep.mubr.bf16.mxu0 0
        %2012 = vmatmul.mubr.bf16.gmra.mrb[0].mxu0 %v1977
        %v2013 = vpop.f32.mrb[0].mxu0
        %v2014 = vadd.f32 0.0, %v2013
        %v2015 = vpop.f32.mrb[0].mxu0
        %v2016 = vpop.f32.mrb[0].mxu0
        %v2017 = vpop.f32.mrb[0].mxu0
        %2018 = vdwg.mxu0
        %v2019 = vmul.f32 %v2014, %v1102
        %v2020 = vadd.f32 %v1968, %v2019
        %2021 = vrot.lane.b32.xlu0 %v1662, 120
        %v2022 = vpop.permute.xlu0 %2021
        %v2024 = vsel %vm1512, %v2022, 0
        %s2026 = scalar_lea.vmem %s6, 28
        %v2027 = vld [vmem:[%s2026] sm:$0xf]
        %v2029 = vsel %vm1670, %v2027, 0
        %2031 = vmatprep.subr.bf16.mxu0 0
        %2032 = vmatpush1.bf16.msra.mxu0 %v2024
        %2033 = vmatprep.subr.bf16.mxu0 0
        %2034 = vmatpush1.bf16.msra.mxu0 0
        %2035 = vmatprep.subr.bf16.mxu0 0
        %2036 = vmatpush1.bf16.msra.mxu0 0
        %2037 = vmatprep.subr.bf16.mxu0 0
        %2038 = vmatpush1.bf16.msra.mxu0 0
        %2039 = vmatprep.subr.bf16.mxu0 0
        %2040 = vmatpush1.bf16.msra.mxu0 0
        %2041 = vmatprep.subr.bf16.mxu0 0
        %2042 = vmatpush1.bf16.msra.mxu0 0
        %2043 = vmatprep.subr.bf16.mxu0 0
        %2044 = vmatpush1.bf16.msra.mxu0 0
        %2045 = vmatprep.subr.bf16.mxu0 0
        %2046 = vmatpush1.bf16.msra.mxu0 0
        %2047 = vmatprep.subr.bf16.mxu0 0
        %2048 = vmatpush1.bf16.msra.mxu0 0
        %2049 = vmatprep.subr.bf16.mxu0 0
        %2050 = vmatpush1.bf16.msra.mxu0 0
        %2051 = vmatprep.subr.bf16.mxu0 0
        %2052 = vmatpush1.bf16.msra.mxu0 0
        %2053 = vmatprep.subr.bf16.mxu0 0
        %2054 = vmatpush1.bf16.msra.mxu0 0
        %2055 = vmatprep.subr.bf16.mxu0 0
        %2056 = vmatpush1.bf16.msra.mxu0 0
        %2057 = vmatprep.subr.bf16.mxu0 0
        %2058 = vmatpush1.bf16.msra.mxu0 0
        %2059 = vmatprep.subr.bf16.mxu0 0
        %2060 = vmatpush1.bf16.msra.mxu0 0
        %2061 = vmatprep.subr.bf16.mxu0 0
        %2062 = vmatpush1.bf16.msra.mxu0 0
        %2063 = vmatprep.mubr.bf16.mxu0 0
        %2064 = vmatmul.mubr.bf16.gmra.mrb[0].mxu0 %v2029
        %v2065 = vpop.f32.mrb[0].mxu0
        %v2066 = vadd.f32 0.0, %v2065
        %v2067 = vpop.f32.mrb[0].mxu0
        %v2068 = vpop.f32.mrb[0].mxu0
        %v2069 = vpop.f32.mrb[0].mxu0
        %2070 = vdwg.mxu0
        %v2071 = vadd.f32 %v2020, %v2066
        %2072 = vrot.lane.b32.xlu0 %v1662, 119
        %v2073 = vpop.permute.xlu0 %2072
        %v2075 = vsel %vm1578, %v2073, 0
        %s2077 = scalar_lea.vmem %s6, 32
        %v2078 = vld [vmem:[%s2077] sm:$0xf]
        %v2080 = vsel %vm1670, %v2078, 0
        %2082 = vmatprep.subr.bf16.mxu0 0
        %2083 = vmatpush1.bf16.msra.mxu0 %v2075
        %2084 = vmatprep.subr.bf16.mxu0 0
        %2085 = vmatpush1.bf16.msra.mxu0 0
        %2086 = vmatprep.subr.bf16.mxu0 0
        %2087 = vmatpush1.bf16.msra.mxu0 0
        %2088 = vmatprep.subr.bf16.mxu0 0
        %2089 = vmatpush1.bf16.msra.mxu0 0
        %2090 = vmatprep.subr.bf16.mxu0 0
        %2091 = vmatpush1.bf16.msra.mxu0 0
        %2092 = vmatprep.subr.bf16.mxu0 0
        %2093 = vmatpush1.bf16.msra.mxu0 0
        %2094 = vmatprep.subr.bf16.mxu0 0
        %2095 = vmatpush1.bf16.msra.mxu0 0
        %2096 = vmatprep.subr.bf16.mxu0 0
        %2097 = vmatpush1.bf16.msra.mxu0 0
        %2098 = vmatprep.subr.bf16.mxu0 0
        %2099 = vmatpush1.bf16.msra.mxu0 0
        %2100 = vmatprep.subr.bf16.mxu0 0
        %2101 = vmatpush1.bf16.msra.mxu0 0
        %2102 = vmatprep.subr.bf16.mxu0 0
        %2103 = vmatpush1.bf16.msra.mxu0 0
        %2104 = vmatprep.subr.bf16.mxu0 0
        %2105 = vmatpush1.bf16.msra.mxu0 0
        %2106 = vmatprep.subr.bf16.mxu0 0
        %2107 = vmatpush1.bf16.msra.mxu0 0
        %2108 = vmatprep.subr.bf16.mxu0 0
        %2109 = vmatpush1.bf16.msra.mxu0 0
        %2110 = vmatprep.subr.bf16.mxu0 0
        %2111 = vmatpush1.bf16.msra.mxu0 0
        %2112 = vmatprep.subr.bf16.mxu0 0
        %2113 = vmatpush1.bf16.msra.mxu0 0
        %2114 = vmatprep.mubr.bf16.mxu0 0
        %2115 = vmatmul.mubr.bf16.gmra.mrb[0].mxu0 %v2080
        %v2116 = vpop.f32.mrb[0].mxu0
        %v2117 = vadd.f32 0.0, %v2116
        %v2118 = vpop.f32.mrb[0].mxu0
        %v2119 = vpop.f32.mrb[0].mxu0
        %v2120 = vpop.f32.mrb[0].mxu0
        %2121 = vdwg.mxu0
        %v2122 = vmul.f32 %v2117, %v1241
        %v2123 = vadd.f32 %v2071, %v2122
        %v2124 = vld [vmem:[%s7] sm:$0xff]
        %2126 = vset.pattern.permute.xlu0 0
        %2127 = vperm.xlu0 %2126, %v2124
        %v2128 = vpop.permute.xlu0 %2127
        %v2130 = vadd.f32 %v2123, %v2128
        %2131 = vst.msk [vmem:[%s311] sm:$0xff] %vm516, %v2130
        %s2132 = sand.u32 %s208, 1
        %s2133 = scalar_lea.sflag [#allocation3], %s2132
        %s2134 = sand.u32 %s208, 1
        %s2135 = smul.addr %s2134, 8
        %s2136 = scalar_lea.vmem [#allocation2], %s2135
        // Predicated region
        $region53: #{tpu_custom_call.1} parent=51 // pred_check
          %p2137 = pneg %p218
        $region54: #{tpu_custom_call.1} parent=51 // pred_check_branch
          %2139 = sbr.rel (%p2137) target = $region56
        $region55: #{tpu_custom_call.1} parent=51 // pred_region
          %s2141 = ssub.s32 128, 128
          %2142 = vsyncadd %s2133, %s2141
          %s2143 = smul.addr %s22, 128
          %s2144 = scalar_lea.hbm %s8, %s2143
          %s2146 = sshll.u32 %s2136, 4
          %s2147 = int_to_ptr.vmem [resolvable:$true] %s2146
          %2149 = dma.vmem_to_hbm [thread:$0]  %s2147, 128, %s2144, %s2133
        $region56: #{tpu_custom_call.1} parent=51 // pred_fallthru
          _
      $region52: #{tpu_custom_call.1} parent=5 // pred_fallthru
        _
      %p2150 = scmp.le.s32.totalorder 2, %s17
      // Predicated region
      $region57: #{tpu_custom_call.1} parent=5 // pred_check
        %p2151 = pneg %p2150
      $region58: #{tpu_custom_call.1} parent=5 // pred_check_branch
        %2153 = sbr.rel (%p2151) target = $region60
      $region59: #{tpu_custom_call.1} parent=5 // pred_region
        %s2154 = ssub.s32 %s17, 2
        // Predicated region
        $region61: #{tpu_custom_call.1} parent=59 // pred_check
          %p2155 = pneg %p224
        $region62: #{tpu_custom_call.1} parent=59 // pred_check_branch
          %2157 = sbr.rel (%p2155) target = $region64
        $region63: #{tpu_custom_call.1} parent=59 // pred_region
          %s2158 = sand.u32 %s209, 1
          %s2159 = scalar_lea.sflag [#allocation3], %s2158
          %s2160 = sand.u32 %s209, 1
          %s2161 = smul.addr %s2160, 8
          %s2162 = scalar_lea.vmem [#allocation2], %s2161
          %2163 = dma.done %s2159, 128
        $region64: #{tpu_custom_call.1} parent=59 // pred_fallthru
          _
      $region60: #{tpu_custom_call.1} parent=5 // pred_fallthru
        _
    $region6: #{tpu_custom_call.1} parent=1 // loop_footer
      %s21 = sadd.s32 1, %s17
    $region7: #{tpu_custom_call.1} parent=1 // loop_footer_branch
      %16 = sbr.rel target = $region3
    $region8: #{tpu_custom_call.1} parent=1 // loop_exit
      _
    %2164 = vsyncpa [#allocation3], 1
    %s2165 = scalar_lea.sflag [#allocation3], 1
    %2166 = vsyncpa %s2165, 1

</llo_original>
